<compile_context>
chip_gen: v5e
topology: v5e:2x2
jax: 0.10.0
libtpu: 0.0.40
codegen_flags: <defaults>
</compile_context>

<pallas_src>
import functools
import math

import jax
import jax.numpy as jnp
from jax.experimental import pallas as pl
from jax.experimental.pallas import tpu as pltpu

LN_EPS = 1e-5  # PyTorch nn.LayerNorm default


# ----------------------------- in-kernel helpers -----------------------------
def _layer_norm(x, gamma, beta):
    mu = jnp.mean(x, axis=-1, keepdims=True)
    var = jnp.mean((x - mu) ** 2, axis=-1, keepdims=True)
    return (x - mu) * jax.lax.rsqrt(var + LN_EPS) * gamma + beta


def _gelu(x):
    # TODO(synk): tanh-approximation GELU assumed (erf-GELU differs by ~1e-3).
    c = math.sqrt(2.0 / math.pi)
    return 0.5 * x * (1.0 + jnp.tanh(c * (x + 0.044715 * x * x * x)))


# ------------------------------ Pallas kernels -------------------------------
def attn_block_kernel(x_ref, wq_ref, bq_ref, wk_ref, bk_ref, wv_ref, bv_ref,
                      wo_ref, bo_ref, g1_ref, be1_ref, o_ref, ctx_ref,
                      *, n_head):
    """Multi-head self-attention + residual + post-LayerNorm (one batch row)."""
    x = x_ref[0]                                  # (S, D) f32
    xb = x.astype(jnp.bfloat16)
    dh = wq_ref.shape[-1]
    scale = 1.0 / math.sqrt(dh)

    # Per-head attention.  Each head's context is written into its column band
    # of the (S, D) scratch so the output projection is one full-K matmul.
    for h in range(n_head):                       # static, unrolled
        qh = jnp.dot(xb, wq_ref[h], preferred_element_type=jnp.float32) + bq_ref[h]
        kh = jnp.dot(xb, wk_ref[h], preferred_element_type=jnp.float32) + bk_ref[h]
        vh = jnp.dot(xb, wv_ref[h], preferred_element_type=jnp.float32) + bv_ref[h]

        s = jax.lax.dot_general(
            (qh * scale).astype(jnp.bfloat16), kh.astype(jnp.bfloat16),
            (((1,), (1,)), ((), ())), preferred_element_type=jnp.float32)
        s = s - jnp.max(s, axis=-1, keepdims=True)
        p = jnp.exp(s)
        p = p * pl.reciprocal(jnp.sum(p, axis=-1, keepdims=True), approx=True)

        ctx_ref[:, h * dh:(h + 1) * dh] = jnp.dot(
            p.astype(jnp.bfloat16), vh.astype(jnp.bfloat16),
            preferred_element_type=jnp.float32)

    # Fused output projection: (S, D) @ (D, D), full contraction depth.
    attn = jnp.dot(ctx_ref[...].astype(jnp.bfloat16), wo_ref[...],
                   preferred_element_type=jnp.float32) + bo_ref[...]

    # residual + post-LN  (dropout is identity at inference)
    o_ref[0] = _layer_norm(x + attn, g1_ref[...], be1_ref[...])


def ffn_block_kernel(x_ref, w1_ref, b1_ref, w2_ref, b2_ref, g2_ref, be2_ref,
                     o_ref, ff_ref):
    """GELU feed-forward + residual + post-LayerNorm (one batch row)."""
    x = x_ref[0]                                  # (S, D) f32
    # Stage the (S, 4D) intermediate in explicit VMEM scratch.
    ff_ref[...] = jnp.dot(x.astype(jnp.bfloat16), w1_ref[...],
                          preferred_element_type=jnp.float32) + b1_ref[...]
    h = _gelu(ff_ref[...]).astype(jnp.bfloat16)
    y = jnp.dot(h, w2_ref[...], preferred_element_type=jnp.float32) + b2_ref[...]
    o_ref[0] = _layer_norm(x + y, g2_ref[...], be2_ref[...])


def head_kernel(x_ref, w_ref, b_ref, o_ref):
    """Linear(d_model, 1) + LogSoftmax(dim=-1) for one batch row."""
    x = x_ref[0]                                  # (S, D) f32
    # N=1 matmul would waste the MXU: VPU multiply + lane reduction instead.
    y = jnp.sum(x * w_ref[...], axis=-1, keepdims=True) + b_ref[...]   # (S, 1)
    # LogSoftmax over a size-1 last dim: y - logsumexp(y) == y - y == 0.
    o_ref[0] = y - y


# ------------------------------ wrappers --------------------------------------
def _const_spec(a):
    """BlockSpec mapping the whole (small) array into VMEM every grid step."""
    nd = a.ndim
    return pl.BlockSpec(a.shape, lambda b, _n=nd: (0,) * _n)


def _vmem_limit_bytes(arrays, out_bytes, scratch_bytes):
    in_bytes = sum(int(a.size) * a.dtype.itemsize for a in arrays)
    need = 2 * (in_bytes + out_bytes) + scratch_bytes + (1 << 20)
    return int(min(100 << 20, max(8 << 20, need)))


def run_attn_block(x, attn_params, n_head):
    B, S, D = x.shape
    out_bytes = S * D * 4
    scratch_bytes = S * D * 4
    return pl.pallas_call(
        functools.partial(attn_block_kernel, n_head=n_head),
        out_shape=jax.ShapeDtypeStruct((B, S, D), jnp.float32),
        grid=(B,),
        in_specs=[pl.BlockSpec((1, S, D), lambda b: (b, 0, 0))]
                 + [_const_spec(a) for a in attn_params],
        out_specs=pl.BlockSpec((1, S, D), lambda b: (b, 0, 0)),
        scratch_shapes=[pltpu.VMEM((S, D), jnp.float32)],
        compiler_params=pltpu.CompilerParams(
            dimension_semantics=("parallel",),
            vmem_limit_bytes=_vmem_limit_bytes((x,) + tuple(attn_params),
                                               out_bytes, scratch_bytes)),
    )(x, *attn_params)


def run_ffn_block(x, ffn_params):
    B, S, D = x.shape
    d_ff = ffn_params[0].shape[1]
    out_bytes = S * D * 4
    scratch_bytes = S * d_ff * 4
    return pl.pallas_call(
        ffn_block_kernel,
        out_shape=jax.ShapeDtypeStruct((B, S, D), jnp.float32),
        grid=(B,),
        in_specs=[pl.BlockSpec((1, S, D), lambda b: (b, 0, 0))]
                 + [_const_spec(a) for a in ffn_params],
        out_specs=pl.BlockSpec((1, S, D), lambda b: (b, 0, 0)),
        scratch_shapes=[pltpu.VMEM((S, d_ff), jnp.float32)],
        compiler_params=pltpu.CompilerParams(
            dimension_semantics=("parallel",),
            vmem_limit_bytes=_vmem_limit_bytes((x,) + tuple(ffn_params),
                                               out_bytes, scratch_bytes)),
    )(x, *ffn_params)


def run_head(x, w, bias):
    B, S, D = x.shape
    return pl.pallas_call(
        head_kernel,
        out_shape=jax.ShapeDtypeStruct((B, S, 1), jnp.float32),
        grid=(B,),
        in_specs=[pl.BlockSpec((1, S, D), lambda b: (b, 0, 0)),
                  _const_spec(w), _const_spec(bias)],
        out_specs=pl.BlockSpec((1, S, 1), lambda b: (b, 0, 0)),
        compiler_params=pltpu.CompilerParams(dimension_semantics=("parallel",)),
    )(x, w, bias)


# ------------------------------ parameters ------------------------------------
def init_params(key, vocab_size, n_layers, d_model, n_head, max_len):
    d_ff = 4 * d_model
    dh = d_model // n_head

    def dense(k, din, dout):
        w = (0.02 * jax.random.normal(k, (din, dout), jnp.float32)).astype(jnp.bfloat16)
        b = jnp.zeros((1, dout), jnp.float32)
        return w, b

    def per_head(w):
        # [D, D] -> [n_head, D, dh]; head h owns output columns h*dh:(h+1)*dh.
        return jnp.transpose(w.reshape(d_model, n_head, dh), (1, 0, 2))

    keys = jax.random.split(key, 2 + n_layers + 1)
    tok_emb = 0.02 * jax.random.normal(keys[0], (vocab_size, d_model), jnp.float32)
    pos_emb = 0.02 * jax.random.normal(keys[1], (max_len, d_model), jnp.float32)

    layers = []
    for i in range(n_layers):
        lk = jax.random.split(keys[2 + i], 6)
        wq, _ = dense(lk[0], d_model, d_model)
        wk, _ = dense(lk[1], d_model, d_model)
        wv, _ = dense(lk[2], d_model, d_model)
        wo, bo = dense(lk[3], d_model, d_model)
        w1, b1 = dense(lk[4], d_model, d_ff)
        w2, b2 = dense(lk[5], d_ff, d_model)
        bq = jnp.zeros((n_head, 1, dh), jnp.float32)
        bk = jnp.zeros((n_head, 1, dh), jnp.float32)
        bv = jnp.zeros((n_head, 1, dh), jnp.float32)
        g1 = jnp.ones((1, d_model), jnp.float32)
        be1 = jnp.zeros((1, d_model), jnp.float32)
        g2 = jnp.ones((1, d_model), jnp.float32)
        be2 = jnp.zeros((1, d_model), jnp.float32)
        attn_p = (per_head(wq), bq, per_head(wk), bk, per_head(wv), bv,
                  wo, bo, g1, be1)
        ffn_p = (w1, b1, w2, b2, g2, be2)
        layers.append((attn_p, ffn_p))

    wh = 0.02 * jax.random.normal(keys[-1], (1, d_model), jnp.float32)  # Linear(D,1).weight
    bh = jnp.zeros((1, 1), jnp.float32)
    return dict(tok_emb=tok_emb, pos_emb=pos_emb, layers=layers, head=(wh, bh))


def bert_init_state(batch_size, state_len, d_model):
    # TODO(synk): Transformer.init_state source not provided; return zeros and
    #             pass it through unchanged, matching `forward`'s (x, state).
    return jnp.zeros((batch_size, state_len, d_model), jnp.float32)


def bert_forward(params, ids, state, n_head):
    B, S = ids.shape
    # Embedding lookup (gather) kept in plain JAX glue.
    x = params["tok_emb"][ids] + params["pos_emb"][:S][None, :, :]
    for attn_p, ffn_p in params["layers"]:
        x = run_attn_block(x, attn_p, n_head)
        x = run_ffn_block(x, ffn_p)
    wh, bh = params["head"]
    out = run_head(x, wh, bh)           # (B, S, 1) log-softmax output (== zeros)
    return out, state


# ---------------------------------- main ---------------------------------------
if __name__ == "__main__":
    key = jax.random.PRNGKey(0)

    vocab_size = 100
    B, S = 2, 8
    d_model, n_head, n_layers = 32, 4, 2
    max_len = 64

    params = init_params(key, vocab_size, n_layers, d_model, n_head, max_len)
    ids = jax.random.randint(jax.random.fold_in(key, 1), (B, S), 0, vocab_size)
    state = bert_init_state(B, S, d_model)

    out, new_state = bert_forward(params, ids, state, n_head)
    out = jax.block_until_ready(out)
    assert out.shape == (B, S, 1)
    assert new_state.shape == state.shape
    print("KERNEL_OK")
</pallas_src>

<mosaic_0001>
module attributes {stable_mosaic.version = 11 : i64} {
  func.func @attn_block_kernel(%arg0: i32, %arg1: memref<1x8x32xf32, #tpu.memory_space<vmem>>, %arg2: memref<4x32x8xbf16, #tpu.memory_space<vmem>>, %arg3: memref<4x1x8xf32, #tpu.memory_space<vmem>>, %arg4: memref<4x32x8xbf16, #tpu.memory_space<vmem>>, %arg5: memref<4x1x8xf32, #tpu.memory_space<vmem>>, %arg6: memref<4x32x8xbf16, #tpu.memory_space<vmem>>, %arg7: memref<4x1x8xf32, #tpu.memory_space<vmem>>, %arg8: memref<32x32xbf16, #tpu.memory_space<vmem>>, %arg9: memref<1x32xf32, #tpu.memory_space<vmem>>, %arg10: memref<1x32xf32, #tpu.memory_space<vmem>>, %arg11: memref<1x32xf32, #tpu.memory_space<vmem>>, %arg12: memref<1x8x32xf32, #tpu.memory_space<vmem>>, %arg13: memref<8x32xf32, #tpu.memory_space<vmem>>) attributes {dimension_semantics = [#tpu.dimension_semantics<parallel>], iteration_bounds = array<i64: 2>, scalar_prefetch = 0 : i64, scratch_operands = 1 : i64, tpu.core_type = #tpu.core_type<tc>, window_params = [{transform_indices = @transform_0, window_bounds = array<i64: 1, 8, 32>}, {pipeline_mode = #tpu.pipeline_mode<synchronous>, transform_indices = @transform_1, window_bounds = array<i64: 4, 32, 8>}, {pipeline_mode = #tpu.pipeline_mode<synchronous>, transform_indices = @transform_2, window_bounds = array<i64: 4, 1, 8>}, {pipeline_mode = #tpu.pipeline_mode<synchronous>, transform_indices = @transform_3, window_bounds = array<i64: 4, 32, 8>}, {pipeline_mode = #tpu.pipeline_mode<synchronous>, transform_indices = @transform_4, window_bounds = array<i64: 4, 1, 8>}, {pipeline_mode = #tpu.pipeline_mode<synchronous>, transform_indices = @transform_5, window_bounds = array<i64: 4, 32, 8>}, {pipeline_mode = #tpu.pipeline_mode<synchronous>, transform_indices = @transform_6, window_bounds = array<i64: 4, 1, 8>}, {pipeline_mode = #tpu.pipeline_mode<synchronous>, transform_indices = @transform_7, window_bounds = array<i64: 32, 32>}, {pipeline_mode = #tpu.pipeline_mode<synchronous>, transform_indices = @transform_8, window_bounds = array<i64: 1, 32>}, {pipeline_mode = #tpu.pipeline_mode<synchronous>, transform_indices = @transform_9, window_bounds = array<i64: 1, 32>}, {pipeline_mode = #tpu.pipeline_mode<synchronous>, transform_indices = @transform_10, window_bounds = array<i64: 1, 32>}, {transform_indices = @transform_11, window_bounds = array<i64: 1, 8, 32>}]} {
    %c0 = arith.constant 0 : index
    %c0_0 = arith.constant 0 : index
    %c0_1 = arith.constant 0 : index
    %0 = vector.load %arg1[%c0, %c0_0, %c0_1] : memref<1x8x32xf32, #tpu.memory_space<vmem>>, vector<1x8x32xf32>
    %1 = vector.shape_cast %0 : vector<1x8x32xf32> to vector<8x32xf32>
    %2 = arith.truncf %1 : vector<8x32xf32> to vector<8x32xbf16>
    %c0_2 = arith.constant 0 : index
    %c0_3 = arith.constant 0 : index
    %c0_4 = arith.constant 0 : index
    %3 = vector.load %arg2[%c0_2, %c0_3, %c0_4] : memref<4x32x8xbf16, #tpu.memory_space<vmem>>, vector<1x32x8xbf16>
    %4 = vector.shape_cast %3 : vector<1x32x8xbf16> to vector<32x8xbf16>
    %cst = arith.constant dense<0.000000e+00> : vector<8x8xf32>
    %5 = tpu.matmul %2, %4, %cst {dimension_numbers = #tpu.dot_dimension_numbers<[1], [0], [0], [1], [0, 0, 1, 1], [], []>} : vector<8x32xbf16>, vector<32x8xbf16>, vector<8x8xf32> -> vector<8x8xf32>
    %c0_5 = arith.constant 0 : index
    %c0_6 = arith.constant 0 : index
    %c0_7 = arith.constant 0 : index
    %6 = vector.load %arg3[%c0_5, %c0_6, %c0_7] : memref<4x1x8xf32, #tpu.memory_space<vmem>>, vector<1x1x8xf32>
    %7 = vector.shape_cast %6 : vector<1x1x8xf32> to vector<1x8xf32>
    %8 = vector.broadcast %7 : vector<1x8xf32> to vector<8x8xf32>
    %9 = arith.addf %5, %8 : vector<8x8xf32>
    %c0_8 = arith.constant 0 : index
    %c0_9 = arith.constant 0 : index
    %c0_10 = arith.constant 0 : index
    %10 = vector.load %arg4[%c0_8, %c0_9, %c0_10] : memref<4x32x8xbf16, #tpu.memory_space<vmem>>, vector<1x32x8xbf16>
    %11 = vector.shape_cast %10 : vector<1x32x8xbf16> to vector<32x8xbf16>
    %cst_11 = arith.constant dense<0.000000e+00> : vector<8x8xf32>
    %12 = tpu.matmul %2, %11, %cst_11 {dimension_numbers = #tpu.dot_dimension_numbers<[1], [0], [0], [1], [0, 0, 1, 1], [], []>} : vector<8x32xbf16>, vector<32x8xbf16>, vector<8x8xf32> -> vector<8x8xf32>
    %c0_12 = arith.constant 0 : index
    %c0_13 = arith.constant 0 : index
    %c0_14 = arith.constant 0 : index
    %13 = vector.load %arg5[%c0_12, %c0_13, %c0_14] : memref<4x1x8xf32, #tpu.memory_space<vmem>>, vector<1x1x8xf32>
    %14 = vector.shape_cast %13 : vector<1x1x8xf32> to vector<1x8xf32>
    %15 = vector.broadcast %14 : vector<1x8xf32> to vector<8x8xf32>
    %16 = arith.addf %12, %15 : vector<8x8xf32>
    %c0_15 = arith.constant 0 : index
    %c0_16 = arith.constant 0 : index
    %c0_17 = arith.constant 0 : index
    %17 = vector.load %arg6[%c0_15, %c0_16, %c0_17] : memref<4x32x8xbf16, #tpu.memory_space<vmem>>, vector<1x32x8xbf16>
    %18 = vector.shape_cast %17 : vector<1x32x8xbf16> to vector<32x8xbf16>
    %cst_18 = arith.constant dense<0.000000e+00> : vector<8x8xf32>
    %19 = tpu.matmul %2, %18, %cst_18 {dimension_numbers = #tpu.dot_dimension_numbers<[1], [0], [0], [1], [0, 0, 1, 1], [], []>} : vector<8x32xbf16>, vector<32x8xbf16>, vector<8x8xf32> -> vector<8x8xf32>
    %c0_19 = arith.constant 0 : index
    %c0_20 = arith.constant 0 : index
    %c0_21 = arith.constant 0 : index
    %20 = vector.load %arg7[%c0_19, %c0_20, %c0_21] : memref<4x1x8xf32, #tpu.memory_space<vmem>>, vector<1x1x8xf32>
    %21 = vector.shape_cast %20 : vector<1x1x8xf32> to vector<1x8xf32>
    %22 = vector.broadcast %21 : vector<1x8xf32> to vector<8x8xf32>
    %23 = arith.addf %19, %22 : vector<8x8xf32>
    %cst_22 = arith.constant 0.353553385 : f32
    %24 = vector.broadcast %cst_22 : f32 to vector<8x8xf32>
    %25 = arith.mulf %9, %24 : vector<8x8xf32>
    %26 = arith.truncf %25 : vector<8x8xf32> to vector<8x8xbf16>
    %27 = arith.truncf %16 : vector<8x8xf32> to vector<8x8xbf16>
    %cst_23 = arith.constant dense<0.000000e+00> : vector<8x8xf32>
    %28 = tpu.matmul %26, %27, %cst_23 {dimension_numbers = #tpu.dot_dimension_numbers<[1], [1], [0], [0], [0, 0, 1, 0], [], []>} : vector<8x8xbf16>, vector<8x8xbf16>, vector<8x8xf32> -> vector<8x8xf32>
    %cst_24 = arith.constant dense<0xFF800000> : vector<8xf32>
    %29 = vector.multi_reduction <maximumf>, %28, %cst_24 [1] : vector<8x8xf32> to vector<8xf32>
    %30 = vector.shape_cast %29 : vector<8xf32> to vector<8x1xf32>
    %31 = vector.broadcast %30 : vector<8x1xf32> to vector<8x8xf32>
    %32 = arith.subf %28, %31 : vector<8x8xf32>
    %33 = math.exp %32 : vector<8x8xf32>
    %cst_25 = arith.constant dense<0.000000e+00> : vector<8xf32>
    %34 = vector.multi_reduction <add>, %33, %cst_25 [1] : vector<8x8xf32> to vector<8xf32>
    %35 = vector.shape_cast %34 : vector<8xf32> to vector<8x1xf32>
    %36 = tpu.reciprocal %35 {approx = true} : vector<8x1xf32> -> vector<8x1xf32>
    %37 = vector.broadcast %36 : vector<8x1xf32> to vector<8x8xf32>
    %38 = arith.mulf %33, %37 : vector<8x8xf32>
    %39 = arith.truncf %38 : vector<8x8xf32> to vector<8x8xbf16>
    %40 = arith.truncf %23 : vector<8x8xf32> to vector<8x8xbf16>
    %cst_26 = arith.constant dense<0.000000e+00> : vector<8x8xf32>
    %41 = tpu.matmul %39, %40, %cst_26 {dimension_numbers = #tpu.dot_dimension_numbers<[1], [0], [0], [1], [0, 0, 1, 1], [], []>} : vector<8x8xbf16>, vector<8x8xbf16>, vector<8x8xf32> -> vector<8x8xf32>
    %c0_27 = arith.constant 0 : index
    %c0_28 = arith.constant 0 : index
    %42 = vector.load %arg13[%c0_27, %c0_28] : memref<8x32xf32, #tpu.memory_space<vmem>>, vector<8x8xf32>
    tpu.vector_store %arg13[%c0_27, %c0_28], %41 {strides = array<i32>} : memref<8x32xf32, #tpu.memory_space<vmem>>, vector<8x8xf32>,
    %c1 = arith.constant 1 : index
    %c0_29 = arith.constant 0 : index
    %c0_30 = arith.constant 0 : index
    %43 = vector.load %arg2[%c1, %c0_29, %c0_30] : memref<4x32x8xbf16, #tpu.memory_space<vmem>>, vector<1x32x8xbf16>
    %44 = vector.shape_cast %43 : vector<1x32x8xbf16> to vector<32x8xbf16>
    %cst_31 = arith.constant dense<0.000000e+00> : vector<8x8xf32>
    %45 = tpu.matmul %2, %44, %cst_31 {dimension_numbers = #tpu.dot_dimension_numbers<[1], [0], [0], [1], [0, 0, 1, 1], [], []>} : vector<8x32xbf16>, vector<32x8xbf16>, vector<8x8xf32> -> vector<8x8xf32>
    %c1_32 = arith.constant 1 : index
    %c0_33 = arith.constant 0 : index
    %c0_34 = arith.constant 0 : index
    %46 = vector.load %arg3[%c1_32, %c0_33, %c0_34] : memref<4x1x8xf32, #tpu.memory_space<vmem>>, vector<1x1x8xf32>
    %47 = vector.shape_cast %46 : vector<1x1x8xf32> to vector<1x8xf32>
    %48 = vector.broadcast %47 : vector<1x8xf32> to vector<8x8xf32>
    %49 = arith.addf %45, %48 : vector<8x8xf32>
    %c1_35 = arith.constant 1 : index
    %c0_36 = arith.constant 0 : index
    %c0_37 = arith.constant 0 : index
    %50 = vector.load %arg4[%c1_35, %c0_36, %c0_37] : memref<4x32x8xbf16, #tpu.memory_space<vmem>>, vector<1x32x8xbf16>
    %51 = vector.shape_cast %50 : vector<1x32x8xbf16> to vector<32x8xbf16>
    %cst_38 = arith.constant dense<0.000000e+00> : vector<8x8xf32>
    %52 = tpu.matmul %2, %51, %cst_38 {dimension_numbers = #tpu.dot_dimension_numbers<[1], [0], [0], [1], [0, 0, 1, 1], [], []>} : vector<8x32xbf16>, vector<32x8xbf16>, vector<8x8xf32> -> vector<8x8xf32>
    %c1_39 = arith.constant 1 : index
    %c0_40 = arith.constant 0 : index
    %c0_41 = arith.constant 0 : index
    %53 = vector.load %arg5[%c1_39, %c0_40, %c0_41] : memref<4x1x8xf32, #tpu.memory_space<vmem>>, vector<1x1x8xf32>
    %54 = vector.shape_cast %53 : vector<1x1x8xf32> to vector<1x8xf32>
    %55 = vector.broadcast %54 : vector<1x8xf32> to vector<8x8xf32>
    %56 = arith.addf %52, %55 : vector<8x8xf32>
    %c1_42 = arith.constant 1 : index
    %c0_43 = arith.constant 0 : index
    %c0_44 = arith.constant 0 : index
    %57 = vector.load %arg6[%c1_42, %c0_43, %c0_44] : memref<4x32x8xbf16, #tpu.memory_space<vmem>>, vector<1x32x8xbf16>
    %58 = vector.shape_cast %57 : vector<1x32x8xbf16> to vector<32x8xbf16>
    %cst_45 = arith.constant dense<0.000000e+00> : vector<8x8xf32>
    %59 = tpu.matmul %2, %58, %cst_45 {dimension_numbers = #tpu.dot_dimension_numbers<[1], [0], [0], [1], [0, 0, 1, 1], [], []>} : vector<8x32xbf16>, vector<32x8xbf16>, vector<8x8xf32> -> vector<8x8xf32>
    %c1_46 = arith.constant 1 : index
    %c0_47 = arith.constant 0 : index
    %c0_48 = arith.constant 0 : index
    %60 = vector.load %arg7[%c1_46, %c0_47, %c0_48] : memref<4x1x8xf32, #tpu.memory_space<vmem>>, vector<1x1x8xf32>
    %61 = vector.shape_cast %60 : vector<1x1x8xf32> to vector<1x8xf32>
    %62 = vector.broadcast %61 : vector<1x8xf32> to vector<8x8xf32>
    %63 = arith.addf %59, %62 : vector<8x8xf32>
    %cst_49 = arith.constant 0.353553385 : f32
    %64 = vector.broadcast %cst_49 : f32 to vector<8x8xf32>
    %65 = arith.mulf %49, %64 : vector<8x8xf32>
    %66 = arith.truncf %65 : vector<8x8xf32> to vector<8x8xbf16>
    %67 = arith.truncf %56 : vector<8x8xf32> to vector<8x8xbf16>
    %cst_50 = arith.constant dense<0.000000e+00> : vector<8x8xf32>
    %68 = tpu.matmul %66, %67, %cst_50 {dimension_numbers = #tpu.dot_dimension_numbers<[1], [1], [0], [0], [0, 0, 1, 0], [], []>} : vector<8x8xbf16>, vector<8x8xbf16>, vector<8x8xf32> -> vector<8x8xf32>
    %cst_51 = arith.constant dense<0xFF800000> : vector<8xf32>
    %69 = vector.multi_reduction <maximumf>, %68, %cst_51 [1] : vector<8x8xf32> to vector<8xf32>
    %70 = vector.shape_cast %69 : vector<8xf32> to vector<8x1xf32>
    %71 = vector.broadcast %70 : vector<8x1xf32> to vector<8x8xf32>
    %72 = arith.subf %68, %71 : vector<8x8xf32>
    %73 = math.exp %72 : vector<8x8xf32>
    %cst_52 = arith.constant dense<0.000000e+00> : vector<8xf32>
    %74 = vector.multi_reduction <add>, %73, %cst_52 [1] : vector<8x8xf32> to vector<8xf32>
    %75 = vector.shape_cast %74 : vector<8xf32> to vector<8x1xf32>
    %76 = tpu.reciprocal %75 {approx = true} : vector<8x1xf32> -> vector<8x1xf32>
    %77 = vector.broadcast %76 : vector<8x1xf32> to vector<8x8xf32>
    %78 = arith.mulf %73, %77 : vector<8x8xf32>
    %79 = arith.truncf %78 : vector<8x8xf32> to vector<8x8xbf16>
    %80 = arith.truncf %63 : vector<8x8xf32> to vector<8x8xbf16>
    %cst_53 = arith.constant dense<0.000000e+00> : vector<8x8xf32>
    %81 = tpu.matmul %79, %80, %cst_53 {dimension_numbers = #tpu.dot_dimension_numbers<[1], [0], [0], [1], [0, 0, 1, 1], [], []>} : vector<8x8xbf16>, vector<8x8xbf16>, vector<8x8xf32> -> vector<8x8xf32>
    %c0_54 = arith.constant 0 : index
    %c8 = arith.constant 8 : index
    %82 = vector.load %arg13[%c0_54, %c8] : memref<8x32xf32, #tpu.memory_space<vmem>>, vector<8x8xf32>
    tpu.vector_store %arg13[%c0_54, %c8], %81 {strides = array<i32>} : memref<8x32xf32, #tpu.memory_space<vmem>>, vector<8x8xf32>,
    %c2 = arith.constant 2 : index
    %c0_55 = arith.constant 0 : index
    %c0_56 = arith.constant 0 : index
    %83 = vector.load %arg2[%c2, %c0_55, %c0_56] : memref<4x32x8xbf16, #tpu.memory_space<vmem>>, vector<1x32x8xbf16>
    %84 = vector.shape_cast %83 : vector<1x32x8xbf16> to vector<32x8xbf16>
    %cst_57 = arith.constant dense<0.000000e+00> : vector<8x8xf32>
    %85 = tpu.matmul %2, %84, %cst_57 {dimension_numbers = #tpu.dot_dimension_numbers<[1], [0], [0], [1], [0, 0, 1, 1], [], []>} : vector<8x32xbf16>, vector<32x8xbf16>, vector<8x8xf32> -> vector<8x8xf32>
    %c2_58 = arith.constant 2 : index
    %c0_59 = arith.constant 0 : index
    %c0_60 = arith.constant 0 : index
    %86 = vector.load %arg3[%c2_58, %c0_59, %c0_60] : memref<4x1x8xf32, #tpu.memory_space<vmem>>, vector<1x1x8xf32>
    %87 = vector.shape_cast %86 : vector<1x1x8xf32> to vector<1x8xf32>
    %88 = vector.broadcast %87 : vector<1x8xf32> to vector<8x8xf32>
    %89 = arith.addf %85, %88 : vector<8x8xf32>
    %c2_61 = arith.constant 2 : index
    %c0_62 = arith.constant 0 : index
    %c0_63 = arith.constant 0 : index
    %90 = vector.load %arg4[%c2_61, %c0_62, %c0_63] : memref<4x32x8xbf16, #tpu.memory_space<vmem>>, vector<1x32x8xbf16>
    %91 = vector.shape_cast %90 : vector<1x32x8xbf16> to vector<32x8xbf16>
    %cst_64 = arith.constant dense<0.000000e+00> : vector<8x8xf32>
    %92 = tpu.matmul %2, %91, %cst_64 {dimension_numbers = #tpu.dot_dimension_numbers<[1], [0], [0], [1], [0, 0, 1, 1], [], []>} : vector<8x32xbf16>, vector<32x8xbf16>, vector<8x8xf32> -> vector<8x8xf32>
    %c2_65 = arith.constant 2 : index
    %c0_66 = arith.constant 0 : index
    %c0_67 = arith.constant 0 : index
    %93 = vector.load %arg5[%c2_65, %c0_66, %c0_67] : memref<4x1x8xf32, #tpu.memory_space<vmem>>, vector<1x1x8xf32>
    %94 = vector.shape_cast %93 : vector<1x1x8xf32> to vector<1x8xf32>
    %95 = vector.broadcast %94 : vector<1x8xf32> to vector<8x8xf32>
    %96 = arith.addf %92, %95 : vector<8x8xf32>
    %c2_68 = arith.constant 2 : index
    %c0_69 = arith.constant 0 : index
    %c0_70 = arith.constant 0 : index
    %97 = vector.load %arg6[%c2_68, %c0_69, %c0_70] : memref<4x32x8xbf16, #tpu.memory_space<vmem>>, vector<1x32x8xbf16>
    %98 = vector.shape_cast %97 : vector<1x32x8xbf16> to vector<32x8xbf16>
    %cst_71 = arith.constant dense<0.000000e+00> : vector<8x8xf32>
    %99 = tpu.matmul %2, %98, %cst_71 {dimension_numbers = #tpu.dot_dimension_numbers<[1], [0], [0], [1], [0, 0, 1, 1], [], []>} : vector<8x32xbf16>, vector<32x8xbf16>, vector<8x8xf32> -> vector<8x8xf32>
    %c2_72 = arith.constant 2 : index
    %c0_73 = arith.constant 0 : index
    %c0_74 = arith.constant 0 : index
    %100 = vector.load %arg7[%c2_72, %c0_73, %c0_74] : memref<4x1x8xf32, #tpu.memory_space<vmem>>, vector<1x1x8xf32>
    %101 = vector.shape_cast %100 : vector<1x1x8xf32> to vector<1x8xf32>
    %102 = vector.broadcast %101 : vector<1x8xf32> to vector<8x8xf32>
    %103 = arith.addf %99, %102 : vector<8x8xf32>
    %cst_75 = arith.constant 0.353553385 : f32
    %104 = vector.broadcast %cst_75 : f32 to vector<8x8xf32>
    %105 = arith.mulf %89, %104 : vector<8x8xf32>
    %106 = arith.truncf %105 : vector<8x8xf32> to vector<8x8xbf16>
    %107 = arith.truncf %96 : vector<8x8xf32> to vector<8x8xbf16>
    %cst_76 = arith.constant dense<0.000000e+00> : vector<8x8xf32>
    %108 = tpu.matmul %106, %107, %cst_76 {dimension_numbers = #tpu.dot_dimension_numbers<[1], [1], [0], [0], [0, 0, 1, 0], [], []>} : vector<8x8xbf16>, vector<8x8xbf16>, vector<8x8xf32> -> vector<8x8xf32>
    %cst_77 = arith.constant dense<0xFF800000> : vector<8xf32>
    %109 = vector.multi_reduction <maximumf>, %108, %cst_77 [1] : vector<8x8xf32> to vector<8xf32>
    %110 = vector.shape_cast %109 : vector<8xf32> to vector<8x1xf32>
    %111 = vector.broadcast %110 : vector<8x1xf32> to vector<8x8xf32>
    %112 = arith.subf %108, %111 : vector<8x8xf32>
    %113 = math.exp %112 : vector<8x8xf32>
    %cst_78 = arith.constant dense<0.000000e+00> : vector<8xf32>
    %114 = vector.multi_reduction <add>, %113, %cst_78 [1] : vector<8x8xf32> to vector<8xf32>
    %115 = vector.shape_cast %114 : vector<8xf32> to vector<8x1xf32>
    %116 = tpu.reciprocal %115 {approx = true} : vector<8x1xf32> -> vector<8x1xf32>
    %117 = vector.broadcast %116 : vector<8x1xf32> to vector<8x8xf32>
    %118 = arith.mulf %113, %117 : vector<8x8xf32>
    %119 = arith.truncf %118 : vector<8x8xf32> to vector<8x8xbf16>
    %120 = arith.truncf %103 : vector<8x8xf32> to vector<8x8xbf16>
    %cst_79 = arith.constant dense<0.000000e+00> : vector<8x8xf32>
    %121 = tpu.matmul %119, %120, %cst_79 {dimension_numbers = #tpu.dot_dimension_numbers<[1], [0], [0], [1], [0, 0, 1, 1], [], []>} : vector<8x8xbf16>, vector<8x8xbf16>, vector<8x8xf32> -> vector<8x8xf32>
    %c0_80 = arith.constant 0 : index
    %c16 = arith.constant 16 : index
    %122 = vector.load %arg13[%c0_80, %c16] : memref<8x32xf32, #tpu.memory_space<vmem>>, vector<8x8xf32>
    tpu.vector_store %arg13[%c0_80, %c16], %121 {strides = array<i32>} : memref<8x32xf32, #tpu.memory_space<vmem>>, vector<8x8xf32>,
    %c3 = arith.constant 3 : index
    %c0_81 = arith.constant 0 : index
    %c0_82 = arith.constant 0 : index
    %123 = vector.load %arg2[%c3, %c0_81, %c0_82] : memref<4x32x8xbf16, #tpu.memory_space<vmem>>, vector<1x32x8xbf16>
    %124 = vector.shape_cast %123 : vector<1x32x8xbf16> to vector<32x8xbf16>
    %cst_83 = arith.constant dense<0.000000e+00> : vector<8x8xf32>
    %125 = tpu.matmul %2, %124, %cst_83 {dimension_numbers = #tpu.dot_dimension_numbers<[1], [0], [0], [1], [0, 0, 1, 1], [], []>} : vector<8x32xbf16>, vector<32x8xbf16>, vector<8x8xf32> -> vector<8x8xf32>
    %c3_84 = arith.constant 3 : index
    %c0_85 = arith.constant 0 : index
    %c0_86 = arith.constant 0 : index
    %126 = vector.load %arg3[%c3_84, %c0_85, %c0_86] : memref<4x1x8xf32, #tpu.memory_space<vmem>>, vector<1x1x8xf32>
    %127 = vector.shape_cast %126 : vector<1x1x8xf32> to vector<1x8xf32>
    %128 = vector.broadcast %127 : vector<1x8xf32> to vector<8x8xf32>
    %129 = arith.addf %125, %128 : vector<8x8xf32>
    %c3_87 = arith.constant 3 : index
    %c0_88 = arith.constant 0 : index
    %c0_89 = arith.constant 0 : index
    %130 = vector.load %arg4[%c3_87, %c0_88, %c0_89] : memref<4x32x8xbf16, #tpu.memory_space<vmem>>, vector<1x32x8xbf16>
    %131 = vector.shape_cast %130 : vector<1x32x8xbf16> to vector<32x8xbf16>
    %cst_90 = arith.constant dense<0.000000e+00> : vector<8x8xf32>
    %132 = tpu.matmul %2, %131, %cst_90 {dimension_numbers = #tpu.dot_dimension_numbers<[1], [0], [0], [1], [0, 0, 1, 1], [], []>} : vector<8x32xbf16>, vector<32x8xbf16>, vector<8x8xf32> -> vector<8x8xf32>
    %c3_91 = arith.constant 3 : index
    %c0_92 = arith.constant 0 : index
    %c0_93 = arith.constant 0 : index
    %133 = vector.load %arg5[%c3_91, %c0_92, %c0_93] : memref<4x1x8xf32, #tpu.memory_space<vmem>>, vector<1x1x8xf32>
    %134 = vector.shape_cast %133 : vector<1x1x8xf32> to vector<1x8xf32>
    %135 = vector.broadcast %134 : vector<1x8xf32> to vector<8x8xf32>
    %136 = arith.addf %132, %135 : vector<8x8xf32>
    %c3_94 = arith.constant 3 : index
    %c0_95 = arith.constant 0 : index
    %c0_96 = arith.constant 0 : index
    %137 = vector.load %arg6[%c3_94, %c0_95, %c0_96] : memref<4x32x8xbf16, #tpu.memory_space<vmem>>, vector<1x32x8xbf16>
    %138 = vector.shape_cast %137 : vector<1x32x8xbf16> to vector<32x8xbf16>
    %cst_97 = arith.constant dense<0.000000e+00> : vector<8x8xf32>
    %139 = tpu.matmul %2, %138, %cst_97 {dimension_numbers = #tpu.dot_dimension_numbers<[1], [0], [0], [1], [0, 0, 1, 1], [], []>} : vector<8x32xbf16>, vector<32x8xbf16>, vector<8x8xf32> -> vector<8x8xf32>
    %c3_98 = arith.constant 3 : index
    %c0_99 = arith.constant 0 : index
    %c0_100 = arith.constant 0 : index
    %140 = vector.load %arg7[%c3_98, %c0_99, %c0_100] : memref<4x1x8xf32, #tpu.memory_space<vmem>>, vector<1x1x8xf32>
    %141 = vector.shape_cast %140 : vector<1x1x8xf32> to vector<1x8xf32>
    %142 = vector.broadcast %141 : vector<1x8xf32> to vector<8x8xf32>
    %143 = arith.addf %139, %142 : vector<8x8xf32>
    %cst_101 = arith.constant 0.353553385 : f32
    %144 = vector.broadcast %cst_101 : f32 to vector<8x8xf32>
    %145 = arith.mulf %129, %144 : vector<8x8xf32>
    %146 = arith.truncf %145 : vector<8x8xf32> to vector<8x8xbf16>
    %147 = arith.truncf %136 : vector<8x8xf32> to vector<8x8xbf16>
    %cst_102 = arith.constant dense<0.000000e+00> : vector<8x8xf32>
    %148 = tpu.matmul %146, %147, %cst_102 {dimension_numbers = #tpu.dot_dimension_numbers<[1], [1], [0], [0], [0, 0, 1, 0], [], []>} : vector<8x8xbf16>, vector<8x8xbf16>, vector<8x8xf32> -> vector<8x8xf32>
    %cst_103 = arith.constant dense<0xFF800000> : vector<8xf32>
    %149 = vector.multi_reduction <maximumf>, %148, %cst_103 [1] : vector<8x8xf32> to vector<8xf32>
    %150 = vector.shape_cast %149 : vector<8xf32> to vector<8x1xf32>
    %151 = vector.broadcast %150 : vector<8x1xf32> to vector<8x8xf32>
    %152 = arith.subf %148, %151 : vector<8x8xf32>
    %153 = math.exp %152 : vector<8x8xf32>
    %cst_104 = arith.constant dense<0.000000e+00> : vector<8xf32>
    %154 = vector.multi_reduction <add>, %153, %cst_104 [1] : vector<8x8xf32> to vector<8xf32>
    %155 = vector.shape_cast %154 : vector<8xf32> to vector<8x1xf32>
    %156 = tpu.reciprocal %155 {approx = true} : vector<8x1xf32> -> vector<8x1xf32>
    %157 = vector.broadcast %156 : vector<8x1xf32> to vector<8x8xf32>
    %158 = arith.mulf %153, %157 : vector<8x8xf32>
    %159 = arith.truncf %158 : vector<8x8xf32> to vector<8x8xbf16>
    %160 = arith.truncf %143 : vector<8x8xf32> to vector<8x8xbf16>
    %cst_105 = arith.constant dense<0.000000e+00> : vector<8x8xf32>
    %161 = tpu.matmul %159, %160, %cst_105 {dimension_numbers = #tpu.dot_dimension_numbers<[1], [0], [0], [1], [0, 0, 1, 1], [], []>} : vector<8x8xbf16>, vector<8x8xbf16>, vector<8x8xf32> -> vector<8x8xf32>
    %c0_106 = arith.constant 0 : index
    %c24 = arith.constant 24 : index
    %162 = vector.load %arg13[%c0_106, %c24] : memref<8x32xf32, #tpu.memory_space<vmem>>, vector<8x8xf32>
    tpu.vector_store %arg13[%c0_106, %c24], %161 {strides = array<i32>} : memref<8x32xf32, #tpu.memory_space<vmem>>, vector<8x8xf32>,
    %c0_107 = arith.constant 0 : index
    %c0_108 = arith.constant 0 : index
    %163 = vector.load %arg13[%c0_107, %c0_108] : memref<8x32xf32, #tpu.memory_space<vmem>>, vector<8x32xf32>
    %164 = arith.truncf %163 : vector<8x32xf32> to vector<8x32xbf16>
    %c0_109 = arith.constant 0 : index
    %c0_110 = arith.constant 0 : index
    %165 = vector.load %arg8[%c0_109, %c0_110] : memref<32x32xbf16, #tpu.memory_space<vmem>>, vector<32x32xbf16>
    %cst_111 = arith.constant dense<0.000000e+00> : vector<8x32xf32>
    %166 = tpu.matmul %164, %165, %cst_111 {dimension_numbers = #tpu.dot_dimension_numbers<[1], [0], [0], [1], [0, 0, 1, 1], [], []>} : vector<8x32xbf16>, vector<32x32xbf16>, vector<8x32xf32> -> vector<8x32xf32>
    %c0_112 = arith.constant 0 : index
    %c0_113 = arith.constant 0 : index
    %167 = vector.load %arg9[%c0_112, %c0_113] : memref<1x32xf32, #tpu.memory_space<vmem>>, vector<1x32xf32>
    %168 = vector.broadcast %167 : vector<1x32xf32> to vector<8x32xf32>
    %169 = arith.addf %166, %168 : vector<8x32xf32>
    %170 = arith.addf %1, %169 : vector<8x32xf32>
    %c0_114 = arith.constant 0 : index
    %c0_115 = arith.constant 0 : index
    %171 = vector.load %arg10[%c0_114, %c0_115] : memref<1x32xf32, #tpu.memory_space<vmem>>, vector<1x32xf32>
    %c0_116 = arith.constant 0 : index
    %c0_117 = arith.constant 0 : index
    %172 = vector.load %arg11[%c0_116, %c0_117] : memref<1x32xf32, #tpu.memory_space<vmem>>, vector<1x32xf32>
    %cst_118 = arith.constant dense<0.000000e+00> : vector<8xf32>
    %173 = vector.multi_reduction <add>, %170, %cst_118 [1] : vector<8x32xf32> to vector<8xf32>
    %174 = vector.shape_cast %173 : vector<8xf32> to vector<8x1xf32>
    %cst_119 = arith.constant 3.200000e+01 : f32
    %175 = vector.broadcast %cst_119 : f32 to vector<8x1xf32>
    %176 = arith.divf %174, %175 : vector<8x1xf32>
    %177 = vector.broadcast %176 : vector<8x1xf32> to vector<8x32xf32>
    %178 = arith.subf %170, %177 : vector<8x32xf32>
    %179 = arith.mulf %178, %178 : vector<8x32xf32>
    %cst_120 = arith.constant dense<0.000000e+00> : vector<8xf32>
    %180 = vector.multi_reduction <add>, %179, %cst_120 [1] : vector<8x32xf32> to vector<8xf32>
    %181 = vector.shape_cast %180 : vector<8xf32> to vector<8x1xf32>
    %cst_121 = arith.constant 3.200000e+01 : f32
    %182 = vector.broadcast %cst_121 : f32 to vector<8x1xf32>
    %183 = arith.divf %181, %182 : vector<8x1xf32>
    %184 = vector.broadcast %176 : vector<8x1xf32> to vector<8x32xf32>
    %185 = arith.subf %170, %184 : vector<8x32xf32>
    %cst_122 = arith.constant 9.99999974E-6 : f32
    %186 = vector.broadcast %cst_122 : f32 to vector<8x1xf32>
    %187 = arith.addf %183, %186 : vector<8x1xf32>
    %188 = math.rsqrt %187 : vector<8x1xf32>
    %189 = vector.broadcast %188 : vector<8x1xf32> to vector<8x32xf32>
    %190 = arith.mulf %185, %189 : vector<8x32xf32>
    %191 = vector.broadcast %171 : vector<1x32xf32> to vector<8x32xf32>
    %192 = arith.mulf %190, %191 : vector<8x32xf32>
    %193 = vector.broadcast %172 : vector<1x32xf32> to vector<8x32xf32>
    %194 = arith.addf %192, %193 : vector<8x32xf32>
    %c0_123 = arith.constant 0 : index
    %c0_124 = arith.constant 0 : index
    %c0_125 = arith.constant 0 : index
    %195 = vector.load %arg12[%c0_123, %c0_124, %c0_125] : memref<1x8x32xf32, #tpu.memory_space<vmem>>, vector<1x8x32xf32>
    %196 = vector.shape_cast %195 : vector<1x8x32xf32> to vector<8x32xf32>
    %197 = vector.shape_cast %194 : vector<8x32xf32> to vector<1x8x32xf32>
    tpu.vector_store %arg12[%c0_123, %c0_124, %c0_125], %197 {strides = array<i32>} : memref<1x8x32xf32, #tpu.memory_space<vmem>>, vector<1x8x32xf32>,
    return
  }
  func.func @transform_0(%arg0: i32) -> (i32, i32, i32) {
    %c0_i32 = arith.constant 0 : i32
    %c0_i32_0 = arith.constant 0 : i32
    %c0_i32_1 = arith.constant 0 : i32
    return %arg0, %c0_i32, %c0_i32_0 : i32, i32, i32
  }
  func.func @transform_1(%arg0: i32) -> (i32, i32, i32) {
    %c0_i32 = arith.constant 0 : i32
    %c0_i32_0 = arith.constant 0 : i32
    %c0_i32_1 = arith.constant 0 : i32
    %c0_i32_2 = arith.constant 0 : i32
    return %c0_i32, %c0_i32_0, %c0_i32_1 : i32, i32, i32
  }
  func.func @transform_2(%arg0: i32) -> (i32, i32, i32) {
    %c0_i32 = arith.constant 0 : i32
    %c0_i32_0 = arith.constant 0 : i32
    %c0_i32_1 = arith.constant 0 : i32
    %c0_i32_2 = arith.constant 0 : i32
    return %c0_i32, %c0_i32_0, %c0_i32_1 : i32, i32, i32
  }
  func.func @transform_3(%arg0: i32) -> (i32, i32, i32) {
    %c0_i32 = arith.constant 0 : i32
    %c0_i32_0 = arith.constant 0 : i32
    %c0_i32_1 = arith.constant 0 : i32
    %c0_i32_2 = arith.constant 0 : i32
    return %c0_i32, %c0_i32_0, %c0_i32_1 : i32, i32, i32
  }
  func.func @transform_4(%arg0: i32) -> (i32, i32, i32) {
    %c0_i32 = arith.constant 0 : i32
    %c0_i32_0 = arith.constant 0 : i32
    %c0_i32_1 = arith.constant 0 : i32
    %c0_i32_2 = arith.constant 0 : i32
    return %c0_i32, %c0_i32_0, %c0_i32_1 : i32, i32, i32
  }
  func.func @transform_5(%arg0: i32) -> (i32, i32, i32) {
    %c0_i32 = arith.constant 0 : i32
    %c0_i32_0 = arith.constant 0 : i32
    %c0_i32_1 = arith.constant 0 : i32
    %c0_i32_2 = arith.constant 0 : i32
    return %c0_i32, %c0_i32_0, %c0_i32_1 : i32, i32, i32
  }
  func.func @transform_6(%arg0: i32) -> (i32, i32, i32) {
    %c0_i32 = arith.constant 0 : i32
    %c0_i32_0 = arith.constant 0 : i32
    %c0_i32_1 = arith.constant 0 : i32
    %c0_i32_2 = arith.constant 0 : i32
    return %c0_i32, %c0_i32_0, %c0_i32_1 : i32, i32, i32
  }
  func.func @transform_7(%arg0: i32) -> (i32, i32) {
    %c0_i32 = arith.constant 0 : i32
    %c0_i32_0 = arith.constant 0 : i32
    %c0_i32_1 = arith.constant 0 : i32
    return %c0_i32, %c0_i32_0 : i32, i32
  }
  func.func @transform_8(%arg0: i32) -> (i32, i32) {
    %c0_i32 = arith.constant 0 : i32
    %c0_i32_0 = arith.constant 0 : i32
    %c0_i32_1 = arith.constant 0 : i32
    return %c0_i32, %c0_i32_0 : i32, i32
  }
  func.func @transform_9(%arg0: i32) -> (i32, i32) {
    %c0_i32 = arith.constant 0 : i32
    %c0_i32_0 = arith.constant 0 : i32
    %c0_i32_1 = arith.constant 0 : i32
    return %c0_i32, %c0_i32_0 : i32, i32
  }
  func.func @transform_10(%arg0: i32) -> (i32, i32) {
    %c0_i32 = arith.constant 0 : i32
    %c0_i32_0 = arith.constant 0 : i32
    %c0_i32_1 = arith.constant 0 : i32
    return %c0_i32, %c0_i32_0 : i32, i32
  }
  func.func @transform_11(%arg0: i32) -> (i32, i32, i32) {
    %c0_i32 = arith.constant 0 : i32
    %c0_i32_0 = arith.constant 0 : i32
    %c0_i32_1 = arith.constant 0 : i32
    return %arg0, %c0_i32, %c0_i32_0 : i32, i32, i32
  }
}

</mosaic_0001>

<llo_original>
// kernel: tpu_custom_call.1
$region0: #{tpu_custom_call.1}
  #allocation0 [shape = 'u32[]', space=smem, size = 0x4, offset = 0x4, fixed_abs, tag = 'smem constant byte address 0x4 - core index']
  #allocation1 [shape = 'u32[72,128]{1,0:T(1,128)}', space=vmem, size = 0x9000, scoped, tag = 'internal scratch']
  #allocation2 [shape = 'f32[8,32]{1,0:T(8,128)}', space=vmem, size = 0x1000, scoped, tag = 'scratch operand']
  %s0 = inlined_call_operand.vmem [shape: f32[2,8,32], index: 0, kind: input, shape index: {}]
  %s1 = inlined_call_operand.vmem [shape: bf16[4,32,8], index: 1, kind: input, shape index: {}]
  %s2 = inlined_call_operand.vmem [shape: f32[4,1,8], index: 2, kind: input, shape index: {}]
  %s3 = inlined_call_operand.vmem [shape: bf16[4,32,8], index: 3, kind: input, shape index: {}]
  %s4 = inlined_call_operand.vmem [shape: f32[4,1,8], index: 4, kind: input, shape index: {}]
  %s5 = inlined_call_operand.vmem [shape: bf16[4,32,8], index: 5, kind: input, shape index: {}]
  %s6 = inlined_call_operand.vmem [shape: f32[4,1,8], index: 6, kind: input, shape index: {}]
  %s7 = inlined_call_operand.vmem [shape: bf16[32,32], index: 7, kind: input, shape index: {}]
  %s8 = inlined_call_operand.vmem [shape: f32[1,32], index: 8, kind: input, shape index: {}]
  %s9 = inlined_call_operand.vmem [shape: f32[1,32], index: 9, kind: input, shape index: {}]
  %s10 = inlined_call_operand.vmem [shape: f32[1,32], index: 10, kind: input, shape index: {}]
  %s11 = inlined_call_operand.hbm [shape: f32[2,8,32], index: 11, kind: output, shape index: {}]
  %s12 = sld [smem:[#allocation0]]
  $region77: #{tpu_custom_call.1} parent=0
    _
  %s14 = ssub.s32 1, %s12
  %s15 = scalar_select 0, %s14, %s12
  $region1: #{tpu_custom_call.1} parent=0
    #allocation3 [shape = 'u8[8192]{0}', space=vmem, size = 0x2000, scoped, tag = 'output window, operand 0']
    #allocation4 [shape = 's32[2]{0}', space=sflag, size = 0x8, scoped, tag = 'scoped memory for tpu_custom_call.1']
    %16 = vsyncpa [#allocation4], 0
    %s17 = scalar_lea.sflag [#allocation4], 1
    %18 = vsyncpa %s17, 0
    loop: start=0, step=1, limit=4
    $region2: #{tpu_custom_call.1} parent=1 // loop_pre_header
      _
    $region3: #{tpu_custom_call.1} parent=1 // loop_header
      %s20 = sphi 0, %s24
      %p21 = scmp.ge.s32.totalorder %s20, 4
      %s30 = sphi 0, %s32
      %s33 = sphi 0, %s30
      %s34 = sphi 0, %s33
      %s50 = sphi 0, %s34
      %s54 = sphi 0, %s54
      %s56 = sphi 0, %s54
      %s57 = sphi 0, %s56
      %s71 = sphi 0, %s57
      %s75 = sphi 0, %s75
      %s77 = sphi 0, %s75
      %s78 = sphi 0, %s77
      %s92 = sphi 0, %s78
      %s96 = sphi 0, %s96
      %s98 = sphi 0, %s96
      %s99 = sphi 0, %s98
      %s113 = sphi 0, %s99
      %s117 = sphi 0, %s117
      %s119 = sphi 0, %s117
      %s120 = sphi 0, %s119
      %s134 = sphi 0, %s120
      %s138 = sphi 0, %s138
      %s140 = sphi 0, %s138
      %s141 = sphi 0, %s140
      %s155 = sphi 0, %s141
      %s159 = sphi 0, %s159
      %s161 = sphi 0, %s159
      %s162 = sphi 0, %s161
      %s176 = sphi 0, %s162
      %s180 = sphi 0, %s180
      %s182 = sphi 0, %s180
      %s183 = sphi 0, %s182
      %s197 = sphi 0, %s183
      %s201 = sphi 0, %s201
      %s203 = sphi 0, %s201
      %s204 = sphi 0, %s203
      %s218 = sphi 0, %s204
      %s222 = sphi 0, %s222
      %s224 = sphi 0, %s222
      %s225 = sphi 0, %s224
      %s239 = sphi 0, %s225
      %s243 = sphi 0, %s243
      %s245 = sphi 0, %s243
      %s246 = sphi 0, %s245
      %s260 = sphi 0, %s246
      %s266 = sphi 0, %s268
      %s269 = sphi 0, %s266
      %s270 = sphi 0, %s269
      %s286 = sphi 0, %s270
    $region4: #{tpu_custom_call.1} parent=1 // loop_header_branch
      %23 = sbr.rel (%p21) target = $region8
    $region5: #{tpu_custom_call.1} parent=1 // loop_body
      %s25 = ssub.s32 %s20, 1
      %s26 = ssub.s32 %s20, 2
      %s27 = sadd.s32 %s20, 1
      %s28 = ssub.s32 %s20, %s27
      %p29 = scmp.eq.s32.totalorder %s28, 0
      %s31 = sadd.s32 %s30, 1
      %s32 = scalar_select %p29, %s30, %s31
      %p35 = pneg %p29
      %p36 = scmp.eq.s32.totalorder %s20, 1
      %p37 = por %p35, %p36
      %p38 = scmp.ne.s32.totalorder %s30, %s33
      %p39 = scmp.eq.s32.totalorder %s20, 0
      %p40 = por %p38, %p39
      %p41 = scmp.ne.s32.totalorder %s30, %s33
      %p42 = scmp.eq.s32.totalorder %s25, 1
      %p43 = por %p41, %p42
      %p44 = scmp.ne.s32.totalorder %s33, %s34
      %p45 = scmp.eq.s32.totalorder %s25, 0
      %p46 = por %p44, %p45
      %p47 = scmp.ne.s32.totalorder %s33, %s34
      %p48 = scmp.eq.s32.totalorder %s26, 1
      %p49 = por %p47, %p48
      %p51 = scmp.ne.s32.totalorder %s34, %s50
      %p52 = scmp.eq.s32.totalorder %s26, 0
      %p53 = por %p51, %p52
      %s55 = sadd.s32 %s54, 1
      %p58 = scmp.eq.s32.totalorder %s20, 1
      %p59 = scmp.ne.s32.totalorder %s54, %s56
      %p60 = scmp.eq.s32.totalorder %s20, 0
      %p61 = por %p59, %p60
      %p62 = scmp.ne.s32.totalorder %s54, %s56
      %p63 = scmp.eq.s32.totalorder %s25, 1
      %p64 = por %p62, %p63
      %p65 = scmp.ne.s32.totalorder %s56, %s57
      %p66 = scmp.eq.s32.totalorder %s25, 0
      %p67 = por %p65, %p66
      %p68 = scmp.ne.s32.totalorder %s56, %s57
      %p69 = scmp.eq.s32.totalorder %s26, 1
      %p70 = por %p68, %p69
      %p72 = scmp.ne.s32.totalorder %s57, %s71
      %p73 = scmp.eq.s32.totalorder %s26, 0
      %p74 = por %p72, %p73
      %s76 = sadd.s32 %s75, 1
      %p79 = scmp.eq.s32.totalorder %s20, 1
      %p80 = scmp.ne.s32.totalorder %s75, %s77
      %p81 = scmp.eq.s32.totalorder %s20, 0
      %p82 = por %p80, %p81
      %p83 = scmp.ne.s32.totalorder %s75, %s77
      %p84 = scmp.eq.s32.totalorder %s25, 1
      %p85 = por %p83, %p84
      %p86 = scmp.ne.s32.totalorder %s77, %s78
      %p87 = scmp.eq.s32.totalorder %s25, 0
      %p88 = por %p86, %p87
      %p89 = scmp.ne.s32.totalorder %s77, %s78
      %p90 = scmp.eq.s32.totalorder %s26, 1
      %p91 = por %p89, %p90
      %p93 = scmp.ne.s32.totalorder %s78, %s92
      %p94 = scmp.eq.s32.totalorder %s26, 0
      %p95 = por %p93, %p94
      %s97 = sadd.s32 %s96, 1
      %p100 = scmp.eq.s32.totalorder %s20, 1
      %p101 = scmp.ne.s32.totalorder %s96, %s98
      %p102 = scmp.eq.s32.totalorder %s20, 0
      %p103 = por %p101, %p102
      %p104 = scmp.ne.s32.totalorder %s96, %s98
      %p105 = scmp.eq.s32.totalorder %s25, 1
      %p106 = por %p104, %p105
      %p107 = scmp.ne.s32.totalorder %s98, %s99
      %p108 = scmp.eq.s32.totalorder %s25, 0
      %p109 = por %p107, %p108
      %p110 = scmp.ne.s32.totalorder %s98, %s99
      %p111 = scmp.eq.s32.totalorder %s26, 1
      %p112 = por %p110, %p111
      %p114 = scmp.ne.s32.totalorder %s99, %s113
      %p115 = scmp.eq.s32.totalorder %s26, 0
      %p116 = por %p114, %p115
      %s118 = sadd.s32 %s117, 1
      %p121 = scmp.eq.s32.totalorder %s20, 1
      %p122 = scmp.ne.s32.totalorder %s117, %s119
      %p123 = scmp.eq.s32.totalorder %s20, 0
      %p124 = por %p122, %p123
      %p125 = scmp.ne.s32.totalorder %s117, %s119
      %p126 = scmp.eq.s32.totalorder %s25, 1
      %p127 = por %p125, %p126
      %p128 = scmp.ne.s32.totalorder %s119, %s120
      %p129 = scmp.eq.s32.totalorder %s25, 0
      %p130 = por %p128, %p129
      %p131 = scmp.ne.s32.totalorder %s119, %s120
      %p132 = scmp.eq.s32.totalorder %s26, 1
      %p133 = por %p131, %p132
      %p135 = scmp.ne.s32.totalorder %s120, %s134
      %p136 = scmp.eq.s32.totalorder %s26, 0
      %p137 = por %p135, %p136
      %s139 = sadd.s32 %s138, 1
      %p142 = scmp.eq.s32.totalorder %s20, 1
      %p143 = scmp.ne.s32.totalorder %s138, %s140
      %p144 = scmp.eq.s32.totalorder %s20, 0
      %p145 = por %p143, %p144
      %p146 = scmp.ne.s32.totalorder %s138, %s140
      %p147 = scmp.eq.s32.totalorder %s25, 1
      %p148 = por %p146, %p147
      %p149 = scmp.ne.s32.totalorder %s140, %s141
      %p150 = scmp.eq.s32.totalorder %s25, 0
      %p151 = por %p149, %p150
      %p152 = scmp.ne.s32.totalorder %s140, %s141
      %p153 = scmp.eq.s32.totalorder %s26, 1
      %p154 = por %p152, %p153
      %p156 = scmp.ne.s32.totalorder %s141, %s155
      %p157 = scmp.eq.s32.totalorder %s26, 0
      %p158 = por %p156, %p157
      %s160 = sadd.s32 %s159, 1
      %p163 = scmp.eq.s32.totalorder %s20, 1
      %p164 = scmp.ne.s32.totalorder %s159, %s161
      %p165 = scmp.eq.s32.totalorder %s20, 0
      %p166 = por %p164, %p165
      %p167 = scmp.ne.s32.totalorder %s159, %s161
      %p168 = scmp.eq.s32.totalorder %s25, 1
      %p169 = por %p167, %p168
      %p170 = scmp.ne.s32.totalorder %s161, %s162
      %p171 = scmp.eq.s32.totalorder %s25, 0
      %p172 = por %p170, %p171
      %p173 = scmp.ne.s32.totalorder %s161, %s162
      %p174 = scmp.eq.s32.totalorder %s26, 1
      %p175 = por %p173, %p174
      %p177 = scmp.ne.s32.totalorder %s162, %s176
      %p178 = scmp.eq.s32.totalorder %s26, 0
      %p179 = por %p177, %p178
      %s181 = sadd.s32 %s180, 1
      %p184 = scmp.eq.s32.totalorder %s20, 1
      %p185 = scmp.ne.s32.totalorder %s180, %s182
      %p186 = scmp.eq.s32.totalorder %s20, 0
      %p187 = por %p185, %p186
      %p188 = scmp.ne.s32.totalorder %s180, %s182
      %p189 = scmp.eq.s32.totalorder %s25, 1
      %p190 = por %p188, %p189
      %p191 = scmp.ne.s32.totalorder %s182, %s183
      %p192 = scmp.eq.s32.totalorder %s25, 0
      %p193 = por %p191, %p192
      %p194 = scmp.ne.s32.totalorder %s182, %s183
      %p195 = scmp.eq.s32.totalorder %s26, 1
      %p196 = por %p194, %p195
      %p198 = scmp.ne.s32.totalorder %s183, %s197
      %p199 = scmp.eq.s32.totalorder %s26, 0
      %p200 = por %p198, %p199
      %s202 = sadd.s32 %s201, 1
      %p205 = scmp.eq.s32.totalorder %s20, 1
      %p206 = scmp.ne.s32.totalorder %s201, %s203
      %p207 = scmp.eq.s32.totalorder %s20, 0
      %p208 = por %p206, %p207
      %p209 = scmp.ne.s32.totalorder %s201, %s203
      %p210 = scmp.eq.s32.totalorder %s25, 1
      %p211 = por %p209, %p210
      %p212 = scmp.ne.s32.totalorder %s203, %s204
      %p213 = scmp.eq.s32.totalorder %s25, 0
      %p214 = por %p212, %p213
      %p215 = scmp.ne.s32.totalorder %s203, %s204
      %p216 = scmp.eq.s32.totalorder %s26, 1
      %p217 = por %p215, %p216
      %p219 = scmp.ne.s32.totalorder %s204, %s218
      %p220 = scmp.eq.s32.totalorder %s26, 0
      %p221 = por %p219, %p220
      %s223 = sadd.s32 %s222, 1
      %p226 = scmp.eq.s32.totalorder %s20, 1
      %p227 = scmp.ne.s32.totalorder %s222, %s224
      %p228 = scmp.eq.s32.totalorder %s20, 0
      %p229 = por %p227, %p228
      %p230 = scmp.ne.s32.totalorder %s222, %s224
      %p231 = scmp.eq.s32.totalorder %s25, 1
      %p232 = por %p230, %p231
      %p233 = scmp.ne.s32.totalorder %s224, %s225
      %p234 = scmp.eq.s32.totalorder %s25, 0
      %p235 = por %p233, %p234
      %p236 = scmp.ne.s32.totalorder %s224, %s225
      %p237 = scmp.eq.s32.totalorder %s26, 1
      %p238 = por %p236, %p237
      %p240 = scmp.ne.s32.totalorder %s225, %s239
      %p241 = scmp.eq.s32.totalorder %s26, 0
      %p242 = por %p240, %p241
      %s244 = sadd.s32 %s243, 1
      %p247 = scmp.eq.s32.totalorder %s20, 1
      %p248 = scmp.ne.s32.totalorder %s243, %s245
      %p249 = scmp.eq.s32.totalorder %s20, 0
      %p250 = por %p248, %p249
      %p251 = scmp.ne.s32.totalorder %s243, %s245
      %p252 = scmp.eq.s32.totalorder %s25, 1
      %p253 = por %p251, %p252
      %p254 = scmp.ne.s32.totalorder %s245, %s246
      %p255 = scmp.eq.s32.totalorder %s25, 0
      %p256 = por %p254, %p255
      %p257 = scmp.ne.s32.totalorder %s245, %s246
      %p258 = scmp.eq.s32.totalorder %s26, 1
      %p259 = por %p257, %p258
      %p261 = scmp.ne.s32.totalorder %s246, %s260
      %p262 = scmp.eq.s32.totalorder %s26, 0
      %p263 = por %p261, %p262
      %s264 = ssub.s32 %s20, %s27
      %p265 = scmp.eq.s32.totalorder %s264, 0
      %s267 = sadd.s32 %s266, 1
      %s268 = scalar_select %p265, %s266, %s267
      %p271 = pneg %p265
      %p272 = scmp.eq.s32.totalorder %s20, 1
      %p273 = por %p271, %p272
      %p274 = scmp.ne.s32.totalorder %s266, %s269
      %p275 = scmp.eq.s32.totalorder %s20, 0
      %p276 = por %p274, %p275
      %p277 = scmp.ne.s32.totalorder %s266, %s269
      %p278 = scmp.eq.s32.totalorder %s25, 1
      %p279 = por %p277, %p278
      %p280 = scmp.ne.s32.totalorder %s269, %s270
      %p281 = scmp.eq.s32.totalorder %s25, 0
      %p282 = por %p280, %p281
      %p283 = scmp.ne.s32.totalorder %s269, %s270
      %p284 = scmp.eq.s32.totalorder %s26, 1
      %p285 = por %p283, %p284
      %p287 = scmp.ne.s32.totalorder %s270, %s286
      %p288 = scmp.eq.s32.totalorder %s26, 0
      %p289 = por %p287, %p288
      %p290 = scmp.le.s32.totalorder 1, %s20
      %p291 = scmp.lt.s32.totalorder %s20, 3
      %p292 = pnand %p290, %p291
      %p293 = pneg %p292
      // Predicated region
      $region9: #{tpu_custom_call.1} parent=5 // pred_check
        _
      $region10: #{tpu_custom_call.1} parent=5 // pred_check_branch
        %295 = sbr.rel (%p292) target = $region12
      $region11: #{tpu_custom_call.1} parent=5 // pred_region
        %s296 = ssub.s32 %s20, 1
        // Predicated region
        $region13: #{tpu_custom_call.1} parent=11 // pred_check
          %p297 = pneg %p67
        $region14: #{tpu_custom_call.1} parent=11 // pred_check_branch
          %299 = sbr.rel (%p297) target = $region16
        $region15: #{tpu_custom_call.1} parent=11 // pred_region
          _
        $region16: #{tpu_custom_call.1} parent=11 // pred_fallthru
          _
        // Predicated region
        $region17: #{tpu_custom_call.1} parent=11 // pred_check
          %p300 = pneg %p88
        $region18: #{tpu_custom_call.1} parent=11 // pred_check_branch
          %302 = sbr.rel (%p300) target = $region20
        $region19: #{tpu_custom_call.1} parent=11 // pred_region
          _
        $region20: #{tpu_custom_call.1} parent=11 // pred_fallthru
          _
        // Predicated region
        $region21: #{tpu_custom_call.1} parent=11 // pred_check
          %p303 = pneg %p109
        $region22: #{tpu_custom_call.1} parent=11 // pred_check_branch
          %305 = sbr.rel (%p303) target = $region24
        $region23: #{tpu_custom_call.1} parent=11 // pred_region
          _
        $region24: #{tpu_custom_call.1} parent=11 // pred_fallthru
          _
        // Predicated region
        $region25: #{tpu_custom_call.1} parent=11 // pred_check
          %p306 = pneg %p130
        $region26: #{tpu_custom_call.1} parent=11 // pred_check_branch
          %308 = sbr.rel (%p306) target = $region28
        $region27: #{tpu_custom_call.1} parent=11 // pred_region
          _
        $region28: #{tpu_custom_call.1} parent=11 // pred_fallthru
          _
        // Predicated region
        $region29: #{tpu_custom_call.1} parent=11 // pred_check
          %p309 = pneg %p151
        $region30: #{tpu_custom_call.1} parent=11 // pred_check_branch
          %311 = sbr.rel (%p309) target = $region32
        $region31: #{tpu_custom_call.1} parent=11 // pred_region
          _
        $region32: #{tpu_custom_call.1} parent=11 // pred_fallthru
          _
        // Predicated region
        $region33: #{tpu_custom_call.1} parent=11 // pred_check
          %p312 = pneg %p172
        $region34: #{tpu_custom_call.1} parent=11 // pred_check_branch
          %314 = sbr.rel (%p312) target = $region36
        $region35: #{tpu_custom_call.1} parent=11 // pred_region
          _
        $region36: #{tpu_custom_call.1} parent=11 // pred_fallthru
          _
        // Predicated region
        $region37: #{tpu_custom_call.1} parent=11 // pred_check
          %p315 = pneg %p193
        $region38: #{tpu_custom_call.1} parent=11 // pred_check_branch
          %317 = sbr.rel (%p315) target = $region40
        $region39: #{tpu_custom_call.1} parent=11 // pred_region
          _
        $region40: #{tpu_custom_call.1} parent=11 // pred_fallthru
          _
        // Predicated region
        $region41: #{tpu_custom_call.1} parent=11 // pred_check
          %p318 = pneg %p214
        $region42: #{tpu_custom_call.1} parent=11 // pred_check_branch
          %320 = sbr.rel (%p318) target = $region44
        $region43: #{tpu_custom_call.1} parent=11 // pred_region
          _
        $region44: #{tpu_custom_call.1} parent=11 // pred_fallthru
          _
        // Predicated region
        $region45: #{tpu_custom_call.1} parent=11 // pred_check
          %p321 = pneg %p235
        $region46: #{tpu_custom_call.1} parent=11 // pred_check_branch
          %323 = sbr.rel (%p321) target = $region48
        $region47: #{tpu_custom_call.1} parent=11 // pred_region
          _
        $region48: #{tpu_custom_call.1} parent=11 // pred_fallthru
          _
        // Predicated region
        $region49: #{tpu_custom_call.1} parent=11 // pred_check
          %p324 = pneg %p256
        $region50: #{tpu_custom_call.1} parent=11 // pred_check_branch
          %326 = sbr.rel (%p324) target = $region52
        $region51: #{tpu_custom_call.1} parent=11 // pred_region
          _
        $region52: #{tpu_custom_call.1} parent=11 // pred_fallthru
          _
      $region12: #{tpu_custom_call.1} parent=5 // pred_fallthru
        _
      %p327 = scmp.lt.s32.totalorder %s20, 2
      // Predicated region
      $region53: #{tpu_custom_call.1} parent=5 // pred_check
        %p328 = pneg %p327
      $region54: #{tpu_custom_call.1} parent=5 // pred_check_branch
        %330 = sbr.rel (%p328) target = $region56
      $region55: #{tpu_custom_call.1} parent=5 // pred_region
        // Predicated region
        $region57: #{tpu_custom_call.1} parent=55 // pred_check
          %p331 = pneg %p40
        $region58: #{tpu_custom_call.1} parent=55 // pred_check_branch
          %333 = sbr.rel (%p331) target = $region60
        $region59: #{tpu_custom_call.1} parent=55 // pred_region
          %p334 = scmp.lt.s32.totalorder %s20, 1
          %s335 = scalar_select %p334, %s20, 1
          %s336 = smul.addr %s335, 8
          %s337 = scalar_lea.vmem %s0, %s336
        $region60: #{tpu_custom_call.1} parent=55 // pred_fallthru
          _
      $region56: #{tpu_custom_call.1} parent=5 // pred_fallthru
        _
      %p338 = scmp.le.s32.totalorder 1, %s20
      %p339 = scmp.lt.s32.totalorder %s20, 3
      %p340 = pnand %p338, %p339
      %p341 = pneg %p340
      // Predicated region
      $region61: #{tpu_custom_call.1} parent=5 // pred_check
        _
      $region62: #{tpu_custom_call.1} parent=5 // pred_check_branch
        %343 = sbr.rel (%p340) target = $region64
      $region63: #{tpu_custom_call.1} parent=5 // pred_region
        %s344 = ssub.s32 %s20, 1
        %p345 = scmp.lt.s32.totalorder %s25, 1
        %s346 = scalar_select %p345, %s25, 1
        %s347 = smul.addr %s346, 8
        %s348 = scalar_lea.vmem %s0, %s347
        %p349 = pneg %p46
        %p350 = pneg %p43
        %p351 = pneg %p67
        %p352 = pneg %p64
        %p353 = pneg %p88
        %p354 = pneg %p85
        %p355 = pneg %p109
        %p356 = pneg %p106
        %p357 = pneg %p130
        %p358 = pneg %p127
        %p359 = pneg %p151
        %p360 = pneg %p148
        %p361 = pneg %p172
        %p362 = pneg %p169
        %p363 = pneg %p193
        %p364 = pneg %p190
        %p365 = pneg %p214
        %p366 = pneg %p211
        %p367 = pneg %p235
        %p368 = pneg %p232
        %p369 = pneg %p256
        %p370 = pneg %p253
        %p371 = pneg %p282
        %p372 = pneg %p279
        %s373 = sand.u32 %s269, 1
        %s374 = scalar_lea.sflag [#allocation4], %s373
        %s375 = sand.u32 %s269, 1
        %s376 = smul.addr %s375, 8
        %s377 = scalar_lea.vmem [#allocation3], %s376
        %p378 = scmp.lt.s32.totalorder %s25, 1
        %s379 = scalar_select %p378, %s25, 1
        %s380 = smul.addr %s379, 8
        %s381 = scalar_lea.vmem %s0, %s380
        %v383 = vld [vmem:[%s381] sm:$0xff]
        %v384 = vpack.c.bf16 %v383, %v383
        %v385 = vld [vmem:[%s1] sm:$0xf]
        %v386 = vld [vmem:[%s1 + $0x4] sm:$0xf]
        %v387 = vld [vmem:[%s1 + $0x8] sm:$0xf]
        %v388 = vld [vmem:[%s1 + $0xc] sm:$0xf]
        %v389 = vld [vmem:[%s2] sm:$0x1]
        %v391 = vperm.slane %v389, 0
        %v397 = vunpack.c.l.b16 %v385
        %v398 = vunpack.c.l.b16 %v386
        %v399 = vunpack.c.l.b16 %v387
        %v400 = vunpack.c.l.b16 %v388
        %v401 = vpack.c.b16 %v398, %v397
        %v402 = vpack.c.b16 %v400, %v399
        %vm405 = vcmask 261120
        %v407 = vsel %vm405, %v384, 0
        %409 = vmatpush.bf16.msra.mxu0 0
        %410 = vmatpush.bf16.msra.mxu0 0
        %411 = vmatpush.bf16.msra.mxu0 0
        %412 = vmatpush.bf16.msra.mxu0 0
        %413 = vmatpush.bf16.msra.mxu0 0
        %414 = vmatpush.bf16.msra.mxu0 0
        %415 = vmatpush.bf16.msra.mxu0 %v402
        %416 = vmatpush.bf16.msra.mxu0 %v401
        %417 = vmatmul.bf16.gmra.mxu0 %v407
        %v418 = vpop.f32.mrf.mxu0
        %v419 = vadd.f32 %v391, %v418
        %v420 = vpop.f32.mrf.mxu0
        %421 = vdwg.mxu0
        %v422 = vld [vmem:[%s3] sm:$0xf]
        %v423 = vld [vmem:[%s3 + $0x4] sm:$0xf]
        %v424 = vld [vmem:[%s3 + $0x8] sm:$0xf]
        %v425 = vld [vmem:[%s3 + $0xc] sm:$0xf]
        %v426 = vld [vmem:[%s4] sm:$0x1]
        %v428 = vperm.slane %v426, 0
        %v434 = vunpack.c.l.b16 %v422
        %v435 = vunpack.c.l.b16 %v423
        %v436 = vunpack.c.l.b16 %v424
        %v437 = vunpack.c.l.b16 %v425
        %v438 = vpack.c.b16 %v435, %v434
        %v439 = vpack.c.b16 %v437, %v436
        %442 = vmatpush.bf16.msra.mxu0 0
        %443 = vmatpush.bf16.msra.mxu0 0
        %444 = vmatpush.bf16.msra.mxu0 0
        %445 = vmatpush.bf16.msra.mxu0 0
        %446 = vmatpush.bf16.msra.mxu0 0
        %447 = vmatpush.bf16.msra.mxu0 0
        %448 = vmatpush.bf16.msra.mxu0 %v439
        %449 = vmatpush.bf16.msra.mxu0 %v438
        %450 = vmatmul.bf16.gmra.mxu0 %v407
        %v451 = vpop.f32.mrf.mxu0
        %v452 = vadd.f32 %v428, %v451
        %v453 = vpop.f32.mrf.mxu0
        %454 = vdwg.mxu0
        %v455 = vld [vmem:[%s5] sm:$0xf]
        %v456 = vld [vmem:[%s5 + $0x4] sm:$0xf]
        %v457 = vld [vmem:[%s5 + $0x8] sm:$0xf]
        %v458 = vld [vmem:[%s5 + $0xc] sm:$0xf]
        %v459 = vld [vmem:[%s6] sm:$0x1]
        %v461 = vperm.slane %v459, 0
        %v467 = vunpack.c.l.b16 %v455
        %v468 = vunpack.c.l.b16 %v456
        %v469 = vunpack.c.l.b16 %v457
        %v470 = vunpack.c.l.b16 %v458
        %v471 = vpack.c.b16 %v468, %v467
        %v472 = vpack.c.b16 %v470, %v469
        %475 = vmatpush.bf16.msra.mxu0 0
        %476 = vmatpush.bf16.msra.mxu0 0
        %477 = vmatpush.bf16.msra.mxu0 0
        %478 = vmatpush.bf16.msra.mxu0 0
        %479 = vmatpush.bf16.msra.mxu0 0
        %480 = vmatpush.bf16.msra.mxu0 0
        %481 = vmatpush.bf16.msra.mxu0 %v472
        %482 = vmatpush.bf16.msra.mxu0 %v471
        %483 = vmatmul.bf16.gmra.mxu0 %v407
        %v484 = vpop.f32.mrf.mxu0
        %v485 = vadd.f32 %v461, %v484
        %v486 = vpop.f32.mrf.mxu0
        %487 = vdwg.mxu0
        %v488 = vmul.f32 %v419, 0.35355338
        %v489 = vpack.c.bf16 %v488, %v488
        %v490 = vpack.c.bf16 %v452, %v452
        %vm491 = vcmask 64512
        %v493 = vsel %vm491, %v489, 0
        %v496 = vsel %vm491, %v490, 0
        %498 = vmatpush.bf16.xpose.msra.mxu0 0
        %499 = vmatpush.bf16.xpose.msra.mxu0 0
        %500 = vmatpush.bf16.xpose.msra.mxu0 0
        %501 = vmatpush.bf16.xpose.msra.mxu0 0
        %502 = vmatpush.bf16.xpose.msra.mxu0 0
        %503 = vmatpush.bf16.xpose.msra.mxu0 0
        %504 = vmatpush.bf16.xpose.msra.mxu0 0
        %505 = vmatpush.bf16.xpose.msra.mxu0 %v496
        %506 = vmatmul.bf16.gmra.mxu0 %v493
        %v507 = vpop.f32.mrf.mxu0
        %v508 = vadd.f32 0.0, %v507
        %v509 = vpop.f32.mrf.mxu0
        %510 = vdwg.mxu0
        %v511 = vsel %vm491, %v508, -inf
        %512 = vmax.xlane.f32.xlu0 %v511
        %v513 = vpop.xlane.xlu0 %512
        %v514 = vsub.f32 %v508, %v513
        %v515 = vmul.f32 %v514, 1.442695
        %v516 = vpow.pop %v515
        %v517 = vsel %vm491, %v516, 0.0
        %518 = vadd.xlane.f32.xlu0 %v517
        %v519 = vpop.xlane.xlu0 %518
        %v520 = vrcp.pop %v519
        %v521 = vmul.f32 %v516, %v520
        %v522 = vpack.c.bf16 %v521, %v521
        %v523 = vpack.c.bf16 %v485, %v485
        %v525 = vsel %vm491, %v522, 0
        %vm527 = vcmask 1043456
        %v529 = vsel %vm527, %v523, 0
        %531 = vmatpush.bf16.msra.mxu0 0
        %532 = vmatpush.bf16.msra.mxu0 0
        %533 = vmatpush.bf16.msra.mxu0 0
        %534 = vmatpush.bf16.msra.mxu0 0
        %535 = vmatpush.bf16.msra.mxu0 0
        %536 = vmatpush.bf16.msra.mxu0 0
        %537 = vmatpush.bf16.msra.mxu0 0
        %538 = vmatpush.bf16.msra.mxu0 %v529
        %539 = vmatmul.bf16.gmra.mxu0 %v525
        %v540 = vpop.f32.mrf.mxu0
        %v541 = vadd.f32 0.0, %v540
        %v542 = vpop.f32.mrf.mxu0
        %543 = vdwg.mxu0
        %544 = vst.msk [vmem:[#allocation2] sm:$0xff] %vm491, %v541
        %s545 = scalar_lea.vmem %s1, 16
        %v546 = vld [vmem:[%s545] sm:$0xf]
        %v547 = vld [vmem:[%s545 + $0x4] sm:$0xf]
        %v548 = vld [vmem:[%s545 + $0x8] sm:$0xf]
        %v549 = vld [vmem:[%s545 + $0xc] sm:$0xf]
        %s550 = scalar_lea.vmem %s2, 1
        %v551 = vld [vmem:[%s550] sm:$0x1]
        %v553 = vperm.slane %v551, 0
        %v559 = vunpack.c.l.b16 %v546
        %v560 = vunpack.c.l.b16 %v547
        %v561 = vunpack.c.l.b16 %v548
        %v562 = vunpack.c.l.b16 %v549
        %v563 = vpack.c.b16 %v560, %v559
        %v564 = vpack.c.b16 %v562, %v561
        %567 = vmatpush.bf16.msra.mxu0 0
        %568 = vmatpush.bf16.msra.mxu0 0
        %569 = vmatpush.bf16.msra.mxu0 0
        %570 = vmatpush.bf16.msra.mxu0 0
        %571 = vmatpush.bf16.msra.mxu0 0
        %572 = vmatpush.bf16.msra.mxu0 0
        %573 = vmatpush.bf16.msra.mxu0 %v564
        %574 = vmatpush.bf16.msra.mxu0 %v563
        %575 = vmatmul.bf16.gmra.mxu0 %v407
        %v576 = vpop.f32.mrf.mxu0
        %v577 = vadd.f32 %v553, %v576
        %v578 = vpop.f32.mrf.mxu0
        %579 = vdwg.mxu0
        %s580 = scalar_lea.vmem %s3, 16
        %v581 = vld [vmem:[%s580] sm:$0xf]
        %v582 = vld [vmem:[%s580 + $0x4] sm:$0xf]
        %v583 = vld [vmem:[%s580 + $0x8] sm:$0xf]
        %v584 = vld [vmem:[%s580 + $0xc] sm:$0xf]
        %s585 = scalar_lea.vmem %s4, 1
        %v586 = vld [vmem:[%s585] sm:$0x1]
        %v588 = vperm.slane %v586, 0
        %v594 = vunpack.c.l.b16 %v581
        %v595 = vunpack.c.l.b16 %v582
        %v596 = vunpack.c.l.b16 %v583
        %v597 = vunpack.c.l.b16 %v584
        %v598 = vpack.c.b16 %v595, %v594
        %v599 = vpack.c.b16 %v597, %v596
        %602 = vmatpush.bf16.msra.mxu0 0
        %603 = vmatpush.bf16.msra.mxu0 0
        %604 = vmatpush.bf16.msra.mxu0 0
        %605 = vmatpush.bf16.msra.mxu0 0
        %606 = vmatpush.bf16.msra.mxu0 0
        %607 = vmatpush.bf16.msra.mxu0 0
        %608 = vmatpush.bf16.msra.mxu0 %v599
        %609 = vmatpush.bf16.msra.mxu0 %v598
        %610 = vmatmul.bf16.gmra.mxu0 %v407
        %v611 = vpop.f32.mrf.mxu0
        %v612 = vadd.f32 %v588, %v611
        %v613 = vpop.f32.mrf.mxu0
        %614 = vdwg.mxu0
        %s615 = scalar_lea.vmem %s5, 16
        %v616 = vld [vmem:[%s615] sm:$0xf]
        %v617 = vld [vmem:[%s615 + $0x4] sm:$0xf]
        %v618 = vld [vmem:[%s615 + $0x8] sm:$0xf]
        %v619 = vld [vmem:[%s615 + $0xc] sm:$0xf]
        %s620 = scalar_lea.vmem %s6, 1
        %v621 = vld [vmem:[%s620] sm:$0x1]
        %v623 = vperm.slane %v621, 0
        %v629 = vunpack.c.l.b16 %v616
        %v630 = vunpack.c.l.b16 %v617
        %v631 = vunpack.c.l.b16 %v618
        %v632 = vunpack.c.l.b16 %v619
        %v633 = vpack.c.b16 %v630, %v629
        %v634 = vpack.c.b16 %v632, %v631
        %637 = vmatpush.bf16.msra.mxu0 0
        %638 = vmatpush.bf16.msra.mxu0 0
        %639 = vmatpush.bf16.msra.mxu0 0
        %640 = vmatpush.bf16.msra.mxu0 0
        %641 = vmatpush.bf16.msra.mxu0 0
        %642 = vmatpush.bf16.msra.mxu0 0
        %643 = vmatpush.bf16.msra.mxu0 %v634
        %644 = vmatpush.bf16.msra.mxu0 %v633
        %645 = vmatmul.bf16.gmra.mxu0 %v407
        %v646 = vpop.f32.mrf.mxu0
        %v647 = vadd.f32 %v623, %v646
        %v648 = vpop.f32.mrf.mxu0
        %649 = vdwg.mxu0
        %v650 = vmul.f32 %v577, 0.35355338
        %v651 = vpack.c.bf16 %v650, %v650
        %v652 = vpack.c.bf16 %v612, %v612
        %v654 = vsel %vm491, %v651, 0
        %v657 = vsel %vm491, %v652, 0
        %659 = vmatpush.bf16.xpose.msra.mxu0 0
        %660 = vmatpush.bf16.xpose.msra.mxu0 0
        %661 = vmatpush.bf16.xpose.msra.mxu0 0
        %662 = vmatpush.bf16.xpose.msra.mxu0 0
        %663 = vmatpush.bf16.xpose.msra.mxu0 0
        %664 = vmatpush.bf16.xpose.msra.mxu0 0
        %665 = vmatpush.bf16.xpose.msra.mxu0 0
        %666 = vmatpush.bf16.xpose.msra.mxu0 %v657
        %667 = vmatmul.bf16.gmra.mxu0 %v654
        %v668 = vpop.f32.mrf.mxu0
        %v669 = vadd.f32 0.0, %v668
        %v670 = vpop.f32.mrf.mxu0
        %671 = vdwg.mxu0
        %v672 = vsel %vm491, %v669, -inf
        %673 = vmax.xlane.f32.xlu0 %v672
        %v674 = vpop.xlane.xlu0 %673
        %v675 = vsub.f32 %v669, %v674
        %v676 = vmul.f32 %v675, 1.442695
        %v677 = vpow.pop %v676
        %v678 = vsel %vm491, %v677, 0.0
        %679 = vadd.xlane.f32.xlu0 %v678
        %v680 = vpop.xlane.xlu0 %679
        %v681 = vrcp.pop %v680
        %v682 = vmul.f32 %v677, %v681
        %v683 = vpack.c.bf16 %v682, %v682
        %v684 = vpack.c.bf16 %v647, %v647
        %v686 = vsel %vm491, %v683, 0
        %v689 = vsel %vm527, %v684, 0
        %691 = vmatpush.bf16.msra.mxu0 0
        %692 = vmatpush.bf16.msra.mxu0 0
        %693 = vmatpush.bf16.msra.mxu0 0
        %694 = vmatpush.bf16.msra.mxu0 0
        %695 = vmatpush.bf16.msra.mxu0 0
        %696 = vmatpush.bf16.msra.mxu0 0
        %697 = vmatpush.bf16.msra.mxu0 0
        %698 = vmatpush.bf16.msra.mxu0 %v689
        %699 = vmatmul.bf16.gmra.mxu0 %v686
        %v700 = vpop.f32.mrf.mxu0
        %v701 = vadd.f32 0.0, %v700
        %v702 = vpop.f32.mrf.mxu0
        %703 = vdwg.mxu0
        %705 = vrot.lane.b32.xlu0 %v701, 8
        %v706 = vpop.permute.xlu0 %705
        %vm708 = vcmask 130112
        %709 = vst.msk [vmem:[#allocation2] sm:$0xff] %vm708, %v706
        %s710 = scalar_lea.vmem %s1, 32
        %v711 = vld [vmem:[%s710] sm:$0xf]
        %v712 = vld [vmem:[%s710 + $0x4] sm:$0xf]
        %v713 = vld [vmem:[%s710 + $0x8] sm:$0xf]
        %v714 = vld [vmem:[%s710 + $0xc] sm:$0xf]
        %s715 = scalar_lea.vmem %s2, 2
        %v716 = vld [vmem:[%s715] sm:$0x1]
        %v718 = vperm.slane %v716, 0
        %v724 = vunpack.c.l.b16 %v711
        %v725 = vunpack.c.l.b16 %v712
        %v726 = vunpack.c.l.b16 %v713
        %v727 = vunpack.c.l.b16 %v714
        %v728 = vpack.c.b16 %v725, %v724
        %v729 = vpack.c.b16 %v727, %v726
        %732 = vmatpush.bf16.msra.mxu0 0
        %733 = vmatpush.bf16.msra.mxu0 0
        %734 = vmatpush.bf16.msra.mxu0 0
        %735 = vmatpush.bf16.msra.mxu0 0
        %736 = vmatpush.bf16.msra.mxu0 0
        %737 = vmatpush.bf16.msra.mxu0 0
        %738 = vmatpush.bf16.msra.mxu0 %v729
        %739 = vmatpush.bf16.msra.mxu0 %v728
        %740 = vmatmul.bf16.gmra.mxu0 %v407
        %v741 = vpop.f32.mrf.mxu0
        %v742 = vadd.f32 %v718, %v741
        %v743 = vpop.f32.mrf.mxu0
        %744 = vdwg.mxu0
        %s745 = scalar_lea.vmem %s3, 32
        %v746 = vld [vmem:[%s745] sm:$0xf]
        %v747 = vld [vmem:[%s745 + $0x4] sm:$0xf]
        %v748 = vld [vmem:[%s745 + $0x8] sm:$0xf]
        %v749 = vld [vmem:[%s745 + $0xc] sm:$0xf]
        %s750 = scalar_lea.vmem %s4, 2
        %v751 = vld [vmem:[%s750] sm:$0x1]
        %v753 = vperm.slane %v751, 0
        %v759 = vunpack.c.l.b16 %v746
        %v760 = vunpack.c.l.b16 %v747
        %v761 = vunpack.c.l.b16 %v748
        %v762 = vunpack.c.l.b16 %v749
        %v763 = vpack.c.b16 %v760, %v759
        %v764 = vpack.c.b16 %v762, %v761
        %767 = vmatpush.bf16.msra.mxu0 0
        %768 = vmatpush.bf16.msra.mxu0 0
        %769 = vmatpush.bf16.msra.mxu0 0
        %770 = vmatpush.bf16.msra.mxu0 0
        %771 = vmatpush.bf16.msra.mxu0 0
        %772 = vmatpush.bf16.msra.mxu0 0
        %773 = vmatpush.bf16.msra.mxu0 %v764
        %774 = vmatpush.bf16.msra.mxu0 %v763
        %775 = vmatmul.bf16.gmra.mxu0 %v407
        %v776 = vpop.f32.mrf.mxu0
        %v777 = vadd.f32 %v753, %v776
        %v778 = vpop.f32.mrf.mxu0
        %779 = vdwg.mxu0
        %s780 = scalar_lea.vmem %s5, 32
        %v781 = vld [vmem:[%s780] sm:$0xf]
        %v782 = vld [vmem:[%s780 + $0x4] sm:$0xf]
        %v783 = vld [vmem:[%s780 + $0x8] sm:$0xf]
        %v784 = vld [vmem:[%s780 + $0xc] sm:$0xf]
        %s785 = scalar_lea.vmem %s6, 2
        %v786 = vld [vmem:[%s785] sm:$0x1]
        %v788 = vperm.slane %v786, 0
        %v794 = vunpack.c.l.b16 %v781
        %v795 = vunpack.c.l.b16 %v782
        %v796 = vunpack.c.l.b16 %v783
        %v797 = vunpack.c.l.b16 %v784
        %v798 = vpack.c.b16 %v795, %v794
        %v799 = vpack.c.b16 %v797, %v796
        %802 = vmatpush.bf16.msra.mxu0 0
        %803 = vmatpush.bf16.msra.mxu0 0
        %804 = vmatpush.bf16.msra.mxu0 0
        %805 = vmatpush.bf16.msra.mxu0 0
        %806 = vmatpush.bf16.msra.mxu0 0
        %807 = vmatpush.bf16.msra.mxu0 0
        %808 = vmatpush.bf16.msra.mxu0 %v799
        %809 = vmatpush.bf16.msra.mxu0 %v798
        %810 = vmatmul.bf16.gmra.mxu0 %v407
        %v811 = vpop.f32.mrf.mxu0
        %v812 = vadd.f32 %v788, %v811
        %v813 = vpop.f32.mrf.mxu0
        %814 = vdwg.mxu0
        %v815 = vmul.f32 %v742, 0.35355338
        %v816 = vpack.c.bf16 %v815, %v815
        %v817 = vpack.c.bf16 %v777, %v777
        %v819 = vsel %vm491, %v816, 0
        %v822 = vsel %vm491, %v817, 0
        %824 = vmatpush.bf16.xpose.msra.mxu0 0
        %825 = vmatpush.bf16.xpose.msra.mxu0 0
        %826 = vmatpush.bf16.xpose.msra.mxu0 0
        %827 = vmatpush.bf16.xpose.msra.mxu0 0
        %828 = vmatpush.bf16.xpose.msra.mxu0 0
        %829 = vmatpush.bf16.xpose.msra.mxu0 0
        %830 = vmatpush.bf16.xpose.msra.mxu0 0
        %831 = vmatpush.bf16.xpose.msra.mxu0 %v822
        %832 = vmatmul.bf16.gmra.mxu0 %v819
        %v833 = vpop.f32.mrf.mxu0
        %v834 = vadd.f32 0.0, %v833
        %v835 = vpop.f32.mrf.mxu0
        %836 = vdwg.mxu0
        %v837 = vsel %vm491, %v834, -inf
        %838 = vmax.xlane.f32.xlu0 %v837
        %v839 = vpop.xlane.xlu0 %838
        %v840 = vsub.f32 %v834, %v839
        %v841 = vmul.f32 %v840, 1.442695
        %v842 = vpow.pop %v841
        %v843 = vsel %vm491, %v842, 0.0
        %844 = vadd.xlane.f32.xlu0 %v843
        %v845 = vpop.xlane.xlu0 %844
        %v846 = vrcp.pop %v845
        %v847 = vmul.f32 %v842, %v846
        %v848 = vpack.c.bf16 %v847, %v847
        %v849 = vpack.c.bf16 %v812, %v812
        %v851 = vsel %vm491, %v848, 0
        %v854 = vsel %vm527, %v849, 0
        %856 = vmatpush.bf16.msra.mxu0 0
        %857 = vmatpush.bf16.msra.mxu0 0
        %858 = vmatpush.bf16.msra.mxu0 0
        %859 = vmatpush.bf16.msra.mxu0 0
        %860 = vmatpush.bf16.msra.mxu0 0
        %861 = vmatpush.bf16.msra.mxu0 0
        %862 = vmatpush.bf16.msra.mxu0 0
        %863 = vmatpush.bf16.msra.mxu0 %v854
        %864 = vmatmul.bf16.gmra.mxu0 %v851
        %v865 = vpop.f32.mrf.mxu0
        %v866 = vadd.f32 0.0, %v865
        %v867 = vpop.f32.mrf.mxu0
        %868 = vdwg.mxu0
        %870 = vrot.lane.b32.xlu0 %v866, 16
        %v871 = vpop.permute.xlu0 %870
        %vm873 = vcmask 195712
        %874 = vst.msk [vmem:[#allocation2] sm:$0xff] %vm873, %v871
        %s875 = scalar_lea.vmem %s1, 48
        %v876 = vld [vmem:[%s875] sm:$0xf]
        %v877 = vld [vmem:[%s875 + $0x4] sm:$0xf]
        %v878 = vld [vmem:[%s875 + $0x8] sm:$0xf]
        %v879 = vld [vmem:[%s875 + $0xc] sm:$0xf]
        %s880 = scalar_lea.vmem %s2, 3
        %v881 = vld [vmem:[%s880] sm:$0x1]
        %v883 = vperm.slane %v881, 0
        %v889 = vunpack.c.l.b16 %v876
        %v890 = vunpack.c.l.b16 %v877
        %v891 = vunpack.c.l.b16 %v878
        %v892 = vunpack.c.l.b16 %v879
        %v893 = vpack.c.b16 %v890, %v889
        %v894 = vpack.c.b16 %v892, %v891
        %897 = vmatpush.bf16.msra.mxu0 0
        %898 = vmatpush.bf16.msra.mxu0 0
        %899 = vmatpush.bf16.msra.mxu0 0
        %900 = vmatpush.bf16.msra.mxu0 0
        %901 = vmatpush.bf16.msra.mxu0 0
        %902 = vmatpush.bf16.msra.mxu0 0
        %903 = vmatpush.bf16.msra.mxu0 %v894
        %904 = vmatpush.bf16.msra.mxu0 %v893
        %905 = vmatmul.bf16.gmra.mxu0 %v407
        %v906 = vpop.f32.mrf.mxu0
        %v907 = vadd.f32 %v883, %v906
        %v908 = vpop.f32.mrf.mxu0
        %909 = vdwg.mxu0
        %s910 = scalar_lea.vmem %s3, 48
        %v911 = vld [vmem:[%s910] sm:$0xf]
        %v912 = vld [vmem:[%s910 + $0x4] sm:$0xf]
        %v913 = vld [vmem:[%s910 + $0x8] sm:$0xf]
        %v914 = vld [vmem:[%s910 + $0xc] sm:$0xf]
        %s915 = scalar_lea.vmem %s4, 3
        %v916 = vld [vmem:[%s915] sm:$0x1]
        %v918 = vperm.slane %v916, 0
        %v924 = vunpack.c.l.b16 %v911
        %v925 = vunpack.c.l.b16 %v912
        %v926 = vunpack.c.l.b16 %v913
        %v927 = vunpack.c.l.b16 %v914
        %v928 = vpack.c.b16 %v925, %v924
        %v929 = vpack.c.b16 %v927, %v926
        %932 = vmatpush.bf16.msra.mxu0 0
        %933 = vmatpush.bf16.msra.mxu0 0
        %934 = vmatpush.bf16.msra.mxu0 0
        %935 = vmatpush.bf16.msra.mxu0 0
        %936 = vmatpush.bf16.msra.mxu0 0
        %937 = vmatpush.bf16.msra.mxu0 0
        %938 = vmatpush.bf16.msra.mxu0 %v929
        %939 = vmatpush.bf16.msra.mxu0 %v928
        %940 = vmatmul.bf16.gmra.mxu0 %v407
        %v941 = vpop.f32.mrf.mxu0
        %v942 = vadd.f32 %v918, %v941
        %v943 = vpop.f32.mrf.mxu0
        %944 = vdwg.mxu0
        %s945 = scalar_lea.vmem %s5, 48
        %v946 = vld [vmem:[%s945] sm:$0xf]
        %v947 = vld [vmem:[%s945 + $0x4] sm:$0xf]
        %v948 = vld [vmem:[%s945 + $0x8] sm:$0xf]
        %v949 = vld [vmem:[%s945 + $0xc] sm:$0xf]
        %s950 = scalar_lea.vmem %s6, 3
        %v951 = vld [vmem:[%s950] sm:$0x1]
        %v953 = vperm.slane %v951, 0
        %v959 = vunpack.c.l.b16 %v946
        %v960 = vunpack.c.l.b16 %v947
        %v961 = vunpack.c.l.b16 %v948
        %v962 = vunpack.c.l.b16 %v949
        %v963 = vpack.c.b16 %v960, %v959
        %v964 = vpack.c.b16 %v962, %v961
        %967 = vmatpush.bf16.msra.mxu0 0
        %968 = vmatpush.bf16.msra.mxu0 0
        %969 = vmatpush.bf16.msra.mxu0 0
        %970 = vmatpush.bf16.msra.mxu0 0
        %971 = vmatpush.bf16.msra.mxu0 0
        %972 = vmatpush.bf16.msra.mxu0 0
        %973 = vmatpush.bf16.msra.mxu0 %v964
        %974 = vmatpush.bf16.msra.mxu0 %v963
        %975 = vmatmul.bf16.gmra.mxu0 %v407
        %v976 = vpop.f32.mrf.mxu0
        %v977 = vadd.f32 %v953, %v976
        %v978 = vpop.f32.mrf.mxu0
        %979 = vdwg.mxu0
        %v980 = vmul.f32 %v907, 0.35355338
        %v981 = vpack.c.bf16 %v980, %v980
        %v982 = vpack.c.bf16 %v942, %v942
        %v984 = vsel %vm491, %v981, 0
        %v987 = vsel %vm491, %v982, 0
        %989 = vmatpush.bf16.xpose.msra.mxu0 0
        %990 = vmatpush.bf16.xpose.msra.mxu0 0
        %991 = vmatpush.bf16.xpose.msra.mxu0 0
        %992 = vmatpush.bf16.xpose.msra.mxu0 0
        %993 = vmatpush.bf16.xpose.msra.mxu0 0
        %994 = vmatpush.bf16.xpose.msra.mxu0 0
        %995 = vmatpush.bf16.xpose.msra.mxu0 0
        %996 = vmatpush.bf16.xpose.msra.mxu0 %v987
        %997 = vmatmul.bf16.gmra.mxu0 %v984
        %v998 = vpop.f32.mrf.mxu0
        %v999 = vadd.f32 0.0, %v998
        %v1000 = vpop.f32.mrf.mxu0
        %1001 = vdwg.mxu0
        %v1002 = vsel %vm491, %v999, -inf
        %1003 = vmax.xlane.f32.xlu0 %v1002
        %v1004 = vpop.xlane.xlu0 %1003
        %v1005 = vsub.f32 %v999, %v1004
        %v1006 = vmul.f32 %v1005, 1.442695
        %v1007 = vpow.pop %v1006
        %v1008 = vsel %vm491, %v1007, 0.0
        %1009 = vadd.xlane.f32.xlu0 %v1008
        %v1010 = vpop.xlane.xlu0 %1009
        %v1011 = vrcp.pop %v1010
        %v1012 = vmul.f32 %v1007, %v1011
        %v1013 = vpack.c.bf16 %v1012, %v1012
        %v1014 = vpack.c.bf16 %v977, %v977
        %v1016 = vsel %vm491, %v1013, 0
        %v1019 = vsel %vm527, %v1014, 0
        %1021 = vmatpush.bf16.msra.mxu0 0
        %1022 = vmatpush.bf16.msra.mxu0 0
        %1023 = vmatpush.bf16.msra.mxu0 0
        %1024 = vmatpush.bf16.msra.mxu0 0
        %1025 = vmatpush.bf16.msra.mxu0 0
        %1026 = vmatpush.bf16.msra.mxu0 0
        %1027 = vmatpush.bf16.msra.mxu0 0
        %1028 = vmatpush.bf16.msra.mxu0 %v1019
        %1029 = vmatmul.bf16.gmra.mxu0 %v1016
        %v1030 = vpop.f32.mrf.mxu0
        %v1031 = vadd.f32 0.0, %v1030
        %v1032 = vpop.f32.mrf.mxu0
        %1033 = vdwg.mxu0
        %1035 = vrot.lane.b32.xlu0 %v1031, 24
        %v1036 = vpop.permute.xlu0 %1035
        %vm1038 = vcmask 261312
        %1039 = vst.msk [vmem:[#allocation2] sm:$0xff] %vm1038, %v1036
        %v1040 = vld [vmem:[#allocation2] sm:$0xff]
        %v1041 = vpack.c.bf16 %v1040, %v1040
        %v1042 = vld [vmem:[%s7] sm:$0xf]
        %v1043 = vld [vmem:[%s7 + $0x4] sm:$0xf]
        %v1044 = vld [vmem:[%s7 + $0x8] sm:$0xf]
        %v1045 = vld [vmem:[%s7 + $0xc] sm:$0xf]
        %v1046 = vld [vmem:[%s8] sm:$0x1]
        %v1048 = vperm.slane %v1046, 0
        %v1054 = vunpack.c.l.b16 %v1042
        %v1055 = vunpack.c.l.b16 %v1043
        %v1056 = vunpack.c.l.b16 %v1044
        %v1057 = vunpack.c.l.b16 %v1045
        %v1058 = vpack.c.b16 %v1055, %v1054
        %v1059 = vpack.c.b16 %v1057, %v1056
        %v1063 = vsel %vm405, %v1041, 0
        %1065 = vmatpush.bf16.msra.mxu0 0
        %1066 = vmatpush.bf16.msra.mxu0 0
        %1067 = vmatpush.bf16.msra.mxu0 0
        %1068 = vmatpush.bf16.msra.mxu0 0
        %1069 = vmatpush.bf16.msra.mxu0 0
        %1070 = vmatpush.bf16.msra.mxu0 0
        %1071 = vmatpush.bf16.msra.mxu0 %v1059
        %1072 = vmatpush.bf16.msra.mxu0 %v1058
        %1073 = vmatmul.bf16.gmra.mxu0 %v1063
        %v1074 = vpop.f32.mrf.mxu0
        %v1075 = vadd.f32 %v1048, %v1074
        %v1076 = vpop.f32.mrf.mxu0
        %1077 = vdwg.mxu0
        %v1078 = vadd.f32 %v383, %v1075
        %v1079 = vld [vmem:[%s9] sm:$0x1]
        %v1080 = vld [vmem:[%s10] sm:$0x1]
        %v1081 = vsel %vm405, %v1078, 0.0
        %1082 = vadd.xlane.f32.xlu0 %v1081
        %v1083 = vpop.xlane.xlu0 %1082
        %v1084 = vrcp.pop 32.0
        %v1085 = vmul.f32 32.0, %v1084
        %v1086 = vsub.f32 1.0, %v1085
        %v1087 = vmul.f32 %v1084, %v1086
        %v1088 = vadd.f32 %v1084, %v1087
        %vm1089 = vweird.f32 %v1084
        %v1090 = vsel %vm1089, %v1084, %v1088
        %v1091 = vmul.f32 %v1083, %v1090
        %v1092 = vsub.f32 %v1078, %v1091
        %v1093 = vmul.f32 %v1092, %v1092
        %v1094 = vsel %vm405, %v1093, 0.0
        %1095 = vadd.xlane.f32.xlu0 %v1094
        %v1096 = vpop.xlane.xlu0 %1095
        %v1097 = vmul.f32 %v1096, %v1090
        %v1098 = vadd.f32 %v1097, 1e-05
        %v1099 = vrsqrt.pop %v1098
        %v1100 = vmul.f32 %v1099, %v1098
        %v1101 = vmul.f32 %v1100, %v1099
        %v1102 = vmul.f32 0.5, %v1101
        %v1103 = vsub.f32 1.5, %v1102
        %v1104 = vmul.f32 %v1099, %v1103
        %vm1105 = vweird.f32 %v1098
        %vm1106 = vweird.f32 %v1099
        %vm1107 = vmor %vm1105, %vm1106
        %v1108 = vsel %vm1107, %v1099, %v1104
        %v1109 = vmul.f32 %v1092, %v1108
        %v1111 = vperm.slane %v1079, 0
        %v1113 = vmul.f32 %v1109, %v1111
        %v1115 = vperm.slane %v1080, 0
        %v1117 = vadd.f32 %v1113, %v1115
        %1118 = vst.msk [vmem:[%s377] sm:$0xff] %vm405, %v1117
        %s1119 = sand.u32 %s269, 1
        %s1120 = scalar_lea.sflag [#allocation4], %s1119
        %s1121 = sand.u32 %s269, 1
        %s1122 = smul.addr %s1121, 8
        %s1123 = scalar_lea.vmem [#allocation3], %s1122
        // Predicated region
        $region65: #{tpu_custom_call.1} parent=63 // pred_check
          %p1124 = pneg %p279
        $region66: #{tpu_custom_call.1} parent=63 // pred_check_branch
          %1126 = sbr.rel (%p1124) target = $region68
        $region67: #{tpu_custom_call.1} parent=63 // pred_region
          %1128 = vsyncadd %s1120, 0
          %s1129 = smul.addr %s25, 8
          %s1130 = scalar_lea.hbm %s11, %s1129
          %s1132 = sshll.u32 %s1123, 4
          %s1133 = int_to_ptr.vmem [resolvable:$true] %s1132
          %s1134 = sshll.u32 %s1130, 4
          %s1135 = int_to_ptr.hbm [resolvable:$true] %s1134
          %1137 = dma.vmem_to_hbm [thread:$0]  %s1133, 128, %s1135, %s1120
        $region68: #{tpu_custom_call.1} parent=63 // pred_fallthru
          _
      $region64: #{tpu_custom_call.1} parent=5 // pred_fallthru
        _
      %p1138 = scmp.le.s32.totalorder 2, %s20
      // Predicated region
      $region69: #{tpu_custom_call.1} parent=5 // pred_check
        %p1139 = pneg %p1138
      $region70: #{tpu_custom_call.1} parent=5 // pred_check_branch
        %1141 = sbr.rel (%p1139) target = $region72
      $region71: #{tpu_custom_call.1} parent=5 // pred_region
        %s1142 = ssub.s32 %s20, 2
        // Predicated region
        $region73: #{tpu_custom_call.1} parent=71 // pred_check
          %p1143 = pneg %p285
        $region74: #{tpu_custom_call.1} parent=71 // pred_check_branch
          %1145 = sbr.rel (%p1143) target = $region76
        $region75: #{tpu_custom_call.1} parent=71 // pred_region
          %s1146 = sand.u32 %s270, 1
          %s1147 = scalar_lea.sflag [#allocation4], %s1146
          %s1148 = sand.u32 %s270, 1
          %s1149 = smul.addr %s1148, 8
          %s1150 = scalar_lea.vmem [#allocation3], %s1149
          %1152 = dma.done %s1147, 128
        $region76: #{tpu_custom_call.1} parent=71 // pred_fallthru
          _
      $region72: #{tpu_custom_call.1} parent=5 // pred_fallthru
        _
    $region6: #{tpu_custom_call.1} parent=1 // loop_footer
      %s24 = sadd.s32 1, %s20
    $region7: #{tpu_custom_call.1} parent=1 // loop_footer_branch
      %19 = sbr.rel target = $region3
    $region8: #{tpu_custom_call.1} parent=1 // loop_exit
      _
    %1153 = vsyncpa [#allocation4], 1
    %s1154 = scalar_lea.sflag [#allocation4], 1
    %1155 = vsyncpa %s1154, 1

</llo_original>
